<compile_context>
chip_gen: v5e
topology: v5e:2x2
jax: 0.10.0
libtpu: 0.0.40
codegen_flags: <defaults>
</compile_context>

<pallas_src>
import functools
import math

import jax
import jax.numpy as jnp
import numpy as np
from jax.experimental import pallas as pl
from jax.experimental.pallas import tpu as pltpu


def _gelu(x):
    # exact (erf-based) GELU, matching torch.nn.functional.gelu default
    return 0.5 * x * (1.0 + jax.lax.erf(x * (1.0 / math.sqrt(2.0))))


def tst_kernel(x_ref, wp_ref, bp_ref, pe_ref,
               wqkv_ref, bqkv_ref, wo_ref, bo_ref,
               w1_ref, b1_ref, w2_ref, b2_ref,
               g1_ref, be1_ref, g2_ref, be2_ref,
               wout_ref, bout_ref,
               out_ref, h_ref, *, n_heads):
    S, B, F = x_ref.shape
    D = wp_ref.shape[1]
    H = n_heads
    dk = D // H
    eps = 1e-5
    layer = pl.program_id(0)

    # ---- layer 0: input projection * sqrt(D) + learnable positional encoding ----
    @pl.when(layer == 0)
    def _():
        x2 = x_ref[...].reshape(S * B, F)
        h0 = jnp.dot(x2, wp_ref[...], preferred_element_type=jnp.float32) + bp_ref[...]
        h0 = h0 * math.sqrt(D)
        h0 = (h0.reshape(S, B, D) + pe_ref[...][:, None, :]).reshape(S * B, D)
        h_ref[...] = h0

    h = h_ref[...]                                                   # (S*B, D)

    # ---- multi-head self-attention (attends over the batch axis, see notes) ----
    # fused q/k/v projection: one MXU push, lane width 3D
    qkv = jnp.dot(h, wqkv_ref[0], preferred_element_type=jnp.float32) + bqkv_ref[0]
    q3 = qkv[:, :D].reshape(S, B, D)
    k3 = qkv[:, D:2 * D].reshape(S, B, D)
    v3 = qkv[:, 2 * D:].reshape(S, B, D)

    # head-selector masks built from iota (no per-head lane slicing anywhere)
    d_idx = jax.lax.broadcasted_iota(jnp.int32, (D, H), 0)
    h_idx = jax.lax.broadcasted_iota(jnp.int32, (D, H), 1)
    hm = ((d_idx >= h_idx * dk) & (d_idx < (h_idx + 1) * dk)).astype(jnp.float32)    # (D, H)
    d_idx_t = jax.lax.broadcasted_iota(jnp.int32, (H, D), 1)
    h_idx_t = jax.lax.broadcasted_iota(jnp.int32, (H, D), 0)
    hm_t = ((d_idx_t >= h_idx_t * dk) &
            (d_idx_t < (h_idx_t + 1) * dk)).astype(jnp.float32)                      # (H, D)

    # all-head scores in one shot: sc[s,b,c,h] = sum_{d in head h} q[s,b,d] k[s,c,d]
    prod = q3[:, :, None, :] * k3[:, None, :, :]                      # (S, B, B, D)
    sc = jnp.dot(prod.reshape(S * B * B, D), hm,
                 preferred_element_type=jnp.float32).reshape(S, B, B, H)
    sc = sc * (1.0 / math.sqrt(dk))
    sc = sc - jnp.max(sc, axis=2, keepdims=True)
    p = jnp.exp(sc)
    p = p * pl.reciprocal(jnp.sum(p, axis=2, keepdims=True), approx=True)
    # expand per-head probs across their dk lanes and contract over the key axis
    p_e = jnp.dot(p.reshape(S * B * B, H), hm_t,
                  preferred_element_type=jnp.float32).reshape(S, B, B, D)
    o3 = jnp.sum(p_e * v3[:, None, :, :], axis=2)                     # (S, B, D)
    # single dense output projection + single bias add
    attn = jnp.dot(o3.reshape(S * B, D), wo_ref[0],
                   preferred_element_type=jnp.float32) + bo_ref[0]

    # ---- residual + BatchNorm1d (per-batch stats, single-pass variance) ----
    src = h + attn
    mu = jnp.mean(src, axis=0, keepdims=True)
    var = jnp.maximum(jnp.mean(src * src, axis=0, keepdims=True) - mu * mu, 0.0)
    src = (src - mu) * jax.lax.rsqrt(var + eps) * g1_ref[0] + be1_ref[0]

    # ---- feed-forward + residual + BatchNorm1d ----
    ff = _gelu(jnp.dot(src, w1_ref[0], preferred_element_type=jnp.float32) + b1_ref[0])
    src = src + jnp.dot(ff, w2_ref[0], preferred_element_type=jnp.float32) + b2_ref[0]
    mu2 = jnp.mean(src, axis=0, keepdims=True)
    var2 = jnp.maximum(jnp.mean(src * src, axis=0, keepdims=True) - mu2 * mu2, 0.0)
    h_new = (src - mu2) * jax.lax.rsqrt(var2 + eps) * g2_ref[0] + be2_ref[0]
    h_ref[...] = h_new                                                # carry to next layer

    # ---- last layer: final GELU + classifier as one batched contraction ----
    @pl.when(layer == pl.num_programs(0) - 1)
    def _():
        y = _gelu(h_new).reshape(S, B, D)
        t = jnp.einsum('sbd,sdc->sbc', y, wout_ref[...],
                       preferred_element_type=jnp.float32)            # (S, B, C)
        out_ref[...] = jnp.sum(t, axis=0) + bout_ref[...]


def ts_transformer_forward(X, params, *, n_heads, num_layers):
    """X: (batch, seq_len, feat_dim) -> (batch, num_classes)."""
    B, S, F = X.shape
    D = params['wp'].shape[1]
    FF = params['w1'].shape[2]
    C = params['bout'].shape[1]
    D3 = 3 * D

    # one-time layout glue (kernel is sequence-major); negligible at these sizes,
    # could be folded into the input-projection layout for large S*B*F.
    x_sbf = jnp.transpose(X, (1, 0, 2))                               # (S, B, F)
    pe = params['pe'][:S]

    # fuse q/k/v weights/biases along the output dim: one matmul per layer
    wqkv = jnp.concatenate([params['aw'][:, 0], params['aw'][:, 1],
                            params['aw'][:, 2]], axis=-1)             # (L, D, 3D)
    bqkv = jnp.concatenate([params['ab'][:, 0], params['ab'][:, 1],
                            params['ab'][:, 2]], axis=-1)             # (L, 1, 3D)
    wo, bo = params['aw'][:, 3], params['ab'][:, 3]                   # (L,D,D), (L,1,D)

    inputs = (x_sbf, params['wp'], params['bp'], pe,
              wqkv, bqkv, wo, bo,
              params['w1'], params['b1'], params['w2'], params['b2'],
              params['g1'], params['be1'], params['g2'], params['be2'],
              params['wout3'], params['bout'])

    def _const(shape):
        rank = len(shape)
        return pl.BlockSpec(shape, lambda l, _r=rank: (0,) * _r)

    def _layer(shape):
        rank = len(shape)
        return pl.BlockSpec((1,) + shape, lambda l, _r=rank: (l,) + (0,) * _r)

    in_specs = [
        _const((S, B, F)),        # x
        _const((F, D)),           # wp
        _const((1, D)),           # bp
        _const((S, D)),           # pe
        _layer((D, D3)),          # wqkv
        _layer((1, D3)),          # bqkv
        _layer((D, D)),           # wo
        _layer((1, D)),           # bo
        _layer((D, FF)),          # w1
        _layer((1, FF)),          # b1
        _layer((FF, D)),          # w2
        _layer((1, D)),           # b2
        _layer((1, D)),           # g1
        _layer((1, D)),           # be1
        _layer((1, D)),           # g2
        _layer((1, D)),           # be2
        _const((S, D, C)),        # wout
        _const((1, C)),           # bout
    ]

    # vmem limit sized from the actual resident/streamed blocks (x2 for double
    # buffering), with generous headroom; capped below v7x physical VMEM.
    block_bytes = sum(int(np.prod(a.shape)) * a.dtype.itemsize for a in inputs)
    vmem_limit = int(min(64 << 20, max(16 << 20, 4 * block_bytes)))

    kernel = functools.partial(tst_kernel, n_heads=n_heads)
    return pl.pallas_call(
        kernel,
        out_shape=jax.ShapeDtypeStruct((B, C), jnp.float32),
        grid_spec=pltpu.PrefetchScalarGridSpec(
            num_scalar_prefetch=0,
            grid=(num_layers,),
            in_specs=in_specs,
            out_specs=pl.BlockSpec((B, C), lambda l: (0, 0)),
            scratch_shapes=[pltpu.VMEM((S * B, D), jnp.float32)],
        ),
        compiler_params=pltpu.CompilerParams(
            dimension_semantics=("arbitrary",),     # layers carry state -> sequential
            vmem_limit_bytes=vmem_limit,
        ),
    )(*inputs)


def init_params(key, feat_dim, max_len, d_model, n_heads, num_layers,
                dim_ff, num_classes):
    def dense(k, fan_in, shape):
        return jax.random.normal(k, shape, jnp.float32) / math.sqrt(fan_in)

    ks = jax.random.split(key, 14)
    params = dict(
        wp=dense(ks[0], feat_dim, (feat_dim, d_model)),
        bp=dense(ks[1], feat_dim, (1, d_model)),
        # LearnablePositionalEncoding: nn.Parameter, init uniform(-0.02, 0.02)
        pe=jax.random.uniform(ks[2], (max_len, d_model), jnp.float32, -0.02, 0.02),
        aw=dense(ks[3], d_model, (num_layers, 4, d_model, d_model)),
        ab=dense(ks[4], d_model, (num_layers, 4, 1, d_model)),
        w1=dense(ks[5], d_model, (num_layers, d_model, dim_ff)),
        b1=dense(ks[6], d_model, (num_layers, 1, dim_ff)),
        w2=dense(ks[7], dim_ff, (num_layers, dim_ff, d_model)),
        b2=dense(ks[8], dim_ff, (num_layers, 1, d_model)),
        g1=1.0 + 0.1 * jax.random.normal(ks[9], (num_layers, 1, d_model), jnp.float32),
        be1=0.1 * jax.random.normal(ks[10], (num_layers, 1, d_model), jnp.float32),
        g2=1.0 + 0.1 * jax.random.normal(ks[11], (num_layers, 1, d_model), jnp.float32),
        be2=0.1 * jax.random.normal(ks[12], (num_layers, 1, d_model), jnp.float32),
        wout3=dense(ks[13], d_model * max_len, (max_len, d_model, num_classes)),
        bout=jnp.zeros((1, num_classes), jnp.float32),
    )
    return params


def ref_forward(X, params, *, n_heads, num_layers):
    """Pure-JAX reference mirroring the PyTorch code structure."""
    B, S, F = X.shape
    D = params['wp'].shape[1]
    dk = D // n_heads
    h = jnp.transpose(X, (1, 0, 2)) @ params['wp'] + params['bp'][0]   # (S,B,D)
    h = h * math.sqrt(D) + params['pe'][:S, None, :]
    for l in range(num_layers):
        q = h @ params['aw'][l, 0] + params['ab'][l, 0, 0]
        k = h @ params['aw'][l, 1] + params['ab'][l, 1, 0]
        v = h @ params['aw'][l, 2] + params['ab'][l, 2, 0]
        split = lambda x: jnp.transpose(x.reshape(S, B, n_heads, dk), (0, 2, 1, 3))
        qh, kh, vh = split(q), split(k), split(v)
        sc = jnp.einsum('shbd,shcd->shbc', qh, kh) / math.sqrt(dk)
        p = jax.nn.softmax(sc, axis=-1)
        o = jnp.einsum('shbc,shcd->shbd', p, vh)
        o = jnp.transpose(o, (0, 2, 1, 3)).reshape(S, B, D)
        src = h + (o @ params['aw'][l, 3] + params['ab'][l, 3, 0])
        x2 = src.reshape(S * B, D)
        mu = x2.mean(axis=0); var = ((x2 - mu) ** 2).mean(axis=0)
        src = ((x2 - mu) / jnp.sqrt(var + 1e-5) * params['g1'][l, 0]
               + params['be1'][l, 0]).reshape(S, B, D)
        ff = jax.nn.gelu(src @ params['w1'][l] + params['b1'][l, 0], approximate=False)
        src = src + (ff @ params['w2'][l] + params['b2'][l, 0])
        x2 = src.reshape(S * B, D)
        mu = x2.mean(axis=0); var = ((x2 - mu) ** 2).mean(axis=0)
        h = ((x2 - mu) / jnp.sqrt(var + 1e-5) * params['g2'][l, 0]
             + params['be2'][l, 0]).reshape(S, B, D)
    out = jax.nn.gelu(h, approximate=False)
    out = jnp.transpose(out, (1, 0, 2)).reshape(B, S * D)
    wout = params['wout3'].reshape(S * D, -1)
    return out @ wout + params['bout'][0]


if __name__ == "__main__":
    feat_dim, max_len, d_model = 4, 8, 32
    n_heads, num_layers, dim_ff, num_classes = 4, 2, 64, 3
    batch = 2

    key = jax.random.PRNGKey(0)
    kx, kp = jax.random.split(key)
    X = jax.random.normal(kx, (batch, max_len, feat_dim), jnp.float32)
    params = init_params(kp, feat_dim, max_len, d_model, n_heads,
                         num_layers, dim_ff, num_classes)

    out = ts_transformer_forward(X, params, n_heads=n_heads, num_layers=num_layers)
    out = jax.block_until_ready(out)
    assert out.shape == (batch, num_classes)

    ref = ref_forward(X, params, n_heads=n_heads, num_layers=num_layers)
    if not jnp.allclose(out, ref, atol=5e-2, rtol=5e-2):
        raise AssertionError(f"mismatch: max abs diff {jnp.max(jnp.abs(out - ref))}")

    print("KERNEL_OK")
</pallas_src>

<mosaic_0001>
module attributes {stable_mosaic.version = 11 : i64} {
  func.func @tst_kernel(%arg0: i32, %arg1: memref<8x2x4xf32, #tpu.memory_space<vmem>>, %arg2: memref<4x32xf32, #tpu.memory_space<vmem>>, %arg3: memref<1x32xf32, #tpu.memory_space<vmem>>, %arg4: memref<8x32xf32, #tpu.memory_space<vmem>>, %arg5: memref<1x32x96xf32, #tpu.memory_space<vmem>>, %arg6: memref<1x1x96xf32, #tpu.memory_space<vmem>>, %arg7: memref<1x32x32xf32, #tpu.memory_space<vmem>>, %arg8: memref<1x1x32xf32, #tpu.memory_space<vmem>>, %arg9: memref<1x32x64xf32, #tpu.memory_space<vmem>>, %arg10: memref<1x1x64xf32, #tpu.memory_space<vmem>>, %arg11: memref<1x64x32xf32, #tpu.memory_space<vmem>>, %arg12: memref<1x1x32xf32, #tpu.memory_space<vmem>>, %arg13: memref<1x1x32xf32, #tpu.memory_space<vmem>>, %arg14: memref<1x1x32xf32, #tpu.memory_space<vmem>>, %arg15: memref<1x1x32xf32, #tpu.memory_space<vmem>>, %arg16: memref<1x1x32xf32, #tpu.memory_space<vmem>>, %arg17: memref<8x32x3xf32, #tpu.memory_space<vmem>>, %arg18: memref<1x3xf32, #tpu.memory_space<vmem>>, %arg19: memref<2x3xf32, #tpu.memory_space<vmem>>, %arg20: memref<16x32xf32, #tpu.memory_space<vmem>>) attributes {dimension_semantics = [#tpu.dimension_semantics<arbitrary>], iteration_bounds = array<i64: 2>, scalar_prefetch = 0 : i64, scratch_operands = 1 : i64, tpu.core_type = #tpu.core_type<tc>, window_params = [{pipeline_mode = #tpu.pipeline_mode<synchronous>, transform_indices = @transform_0, window_bounds = array<i64: 8, 2, 4>}, {pipeline_mode = #tpu.pipeline_mode<synchronous>, transform_indices = @transform_1, window_bounds = array<i64: 4, 32>}, {pipeline_mode = #tpu.pipeline_mode<synchronous>, transform_indices = @transform_2, window_bounds = array<i64: 1, 32>}, {pipeline_mode = #tpu.pipeline_mode<synchronous>, transform_indices = @transform_3, window_bounds = array<i64: 8, 32>}, {transform_indices = @transform_4, window_bounds = array<i64: 1, 32, 96>}, {transform_indices = @transform_5, window_bounds = array<i64: 1, 1, 96>}, {transform_indices = @transform_6, window_bounds = array<i64: 1, 32, 32>}, {transform_indices = @transform_7, window_bounds = array<i64: 1, 1, 32>}, {transform_indices = @transform_8, window_bounds = array<i64: 1, 32, 64>}, {transform_indices = @transform_9, window_bounds = array<i64: 1, 1, 64>}, {transform_indices = @transform_10, window_bounds = array<i64: 1, 64, 32>}, {transform_indices = @transform_11, window_bounds = array<i64: 1, 1, 32>}, {transform_indices = @transform_12, window_bounds = array<i64: 1, 1, 32>}, {transform_indices = @transform_13, window_bounds = array<i64: 1, 1, 32>}, {transform_indices = @transform_14, window_bounds = array<i64: 1, 1, 32>}, {transform_indices = @transform_15, window_bounds = array<i64: 1, 1, 32>}, {pipeline_mode = #tpu.pipeline_mode<synchronous>, transform_indices = @transform_16, window_bounds = array<i64: 8, 32, 3>}, {pipeline_mode = #tpu.pipeline_mode<synchronous>, transform_indices = @transform_17, window_bounds = array<i64: 1, 3>}, {pipeline_mode = #tpu.pipeline_mode<synchronous>, transform_indices = @transform_18, window_bounds = array<i64: 2, 3>}]} {
    %c0_i32 = arith.constant 0 : i32
    %0 = arith.cmpi eq, %arg0, %c0_i32 : i32
    %1 = arith.extui %0 : i1 to i32
    %c0_i32_0 = arith.constant 0 : i32
    %2 = arith.cmpi ne, %1, %c0_i32_0 : i32
    scf.if %2 {
      %c0_70 = arith.constant 0 : index
      %c0_71 = arith.constant 0 : index
      %c0_72 = arith.constant 0 : index
      %162 = vector.load %arg1[%c0_70, %c0_71, %c0_72] : memref<8x2x4xf32, #tpu.memory_space<vmem>>, vector<8x2x4xf32>
      %163 = vector.shape_cast %162 : vector<8x2x4xf32> to vector<16x4xf32>
      %c0_73 = arith.constant 0 : index
      %c0_74 = arith.constant 0 : index
      %164 = vector.load %arg2[%c0_73, %c0_74] : memref<4x32xf32, #tpu.memory_space<vmem>>, vector<4x32xf32>
      %cst_75 = arith.constant dense<0.000000e+00> : vector<16x32xf32>
      %165 = tpu.matmul %163, %164, %cst_75 {dimension_numbers = #tpu.dot_dimension_numbers<[1], [0], [0], [1], [0, 0, 1, 1], [], []>} : vector<16x4xf32>, vector<4x32xf32>, vector<16x32xf32> -> vector<16x32xf32>
      %c0_76 = arith.constant 0 : index
      %c0_77 = arith.constant 0 : index
      %166 = vector.load %arg3[%c0_76, %c0_77] : memref<1x32xf32, #tpu.memory_space<vmem>>, vector<1x32xf32>
      %167 = vector.broadcast %166 : vector<1x32xf32> to vector<16x32xf32>
      %168 = arith.addf %165, %167 : vector<16x32xf32>
      %cst_78 = arith.constant 5.65685415 : f32
      %169 = vector.broadcast %cst_78 : f32 to vector<16x32xf32>
      %170 = arith.mulf %168, %169 : vector<16x32xf32>
      %171 = vector.shape_cast %170 : vector<16x32xf32> to vector<8x2x32xf32>
      %c0_79 = arith.constant 0 : index
      %c0_80 = arith.constant 0 : index
      %172 = vector.load %arg4[%c0_79, %c0_80] : memref<8x32xf32, #tpu.memory_space<vmem>>, vector<8x32xf32>
      %173 = vector.shape_cast %172 : vector<8x32xf32> to vector<8x1x32xf32>
      %174 = vector.broadcast %173 : vector<8x1x32xf32> to vector<8x2x32xf32>
      %175 = arith.addf %171, %174 : vector<8x2x32xf32>
      %176 = vector.shape_cast %175 : vector<8x2x32xf32> to vector<16x32xf32>
      %c0_81 = arith.constant 0 : index
      %c0_82 = arith.constant 0 : index
      %177 = vector.load %arg20[%c0_81, %c0_82] : memref<16x32xf32, #tpu.memory_space<vmem>>, vector<16x32xf32>
      tpu.vector_store %arg20[%c0_81, %c0_82], %176 {strides = array<i32>} : memref<16x32xf32, #tpu.memory_space<vmem>>, vector<16x32xf32>,
    } else {
    }
    %c0 = arith.constant 0 : index
    %c0_1 = arith.constant 0 : index
    %3 = vector.load %arg20[%c0, %c0_1] : memref<16x32xf32, #tpu.memory_space<vmem>>, vector<16x32xf32>
    %c0_2 = arith.constant 0 : index
    %c0_3 = arith.constant 0 : index
    %c0_4 = arith.constant 0 : index
    %4 = vector.load %arg5[%c0_2, %c0_3, %c0_4] : memref<1x32x96xf32, #tpu.memory_space<vmem>>, vector<1x32x96xf32>
    %5 = vector.shape_cast %4 : vector<1x32x96xf32> to vector<32x96xf32>
    %cst = arith.constant dense<0.000000e+00> : vector<16x96xf32>
    %6 = tpu.matmul %3, %5, %cst {dimension_numbers = #tpu.dot_dimension_numbers<[1], [0], [0], [1], [0, 0, 1, 1], [], []>} : vector<16x32xf32>, vector<32x96xf32>, vector<16x96xf32> -> vector<16x96xf32>
    %c0_5 = arith.constant 0 : index
    %c0_6 = arith.constant 0 : index
    %c0_7 = arith.constant 0 : index
    %7 = vector.load %arg6[%c0_5, %c0_6, %c0_7] : memref<1x1x96xf32, #tpu.memory_space<vmem>>, vector<1x1x96xf32>
    %8 = vector.shape_cast %7 : vector<1x1x96xf32> to vector<1x96xf32>
    %9 = vector.broadcast %8 : vector<1x96xf32> to vector<16x96xf32>
    %10 = arith.addf %6, %9 : vector<16x96xf32>
    %11 = vector.extract_strided_slice %10 {offsets = [0, 0], sizes = [16, 32], strides = [1, 1]} : vector<16x96xf32> to vector<16x32xf32>
    %12 = vector.shape_cast %11 : vector<16x32xf32> to vector<8x2x32xf32>
    %13 = vector.extract_strided_slice %10 {offsets = [0, 32], sizes = [16, 32], strides = [1, 1]} : vector<16x96xf32> to vector<16x32xf32>
    %14 = vector.shape_cast %13 : vector<16x32xf32> to vector<8x2x32xf32>
    %15 = vector.extract_strided_slice %10 {offsets = [0, 64], sizes = [16, 32], strides = [1, 1]} : vector<16x96xf32> to vector<16x32xf32>
    %16 = vector.shape_cast %15 : vector<16x32xf32> to vector<8x2x32xf32>
    %17 = tpu.iota {dimensions = array<i32: 0>} : vector<32x4xi32>
    %18 = tpu.iota {dimensions = array<i32: 1>} : vector<32x4xi32>
    %c8_i32 = arith.constant 8 : i32
    %19 = vector.broadcast %c8_i32 : i32 to vector<32x4xi32>
    %20 = arith.muli %18, %19 : vector<32x4xi32>
    %21 = arith.cmpi sge, %17, %20 : vector<32x4xi32>
    %c1_i32 = arith.constant 1 : i32
    %22 = vector.broadcast %c1_i32 : i32 to vector<32x4xi32>
    %23 = arith.addi %18, %22 : vector<32x4xi32>
    %c8_i32_8 = arith.constant 8 : i32
    %24 = vector.broadcast %c8_i32_8 : i32 to vector<32x4xi32>
    %25 = arith.muli %23, %24 : vector<32x4xi32>
    %26 = arith.cmpi slt, %17, %25 : vector<32x4xi32>
    %27 = arith.andi %21, %26 : vector<32x4xi1>
    %28 = arith.extui %27 : vector<32x4xi1> to vector<32x4xi32>
    %29 = arith.sitofp %28 : vector<32x4xi32> to vector<32x4xf32>
    %30 = tpu.iota {dimensions = array<i32: 1>} : vector<4x32xi32>
    %31 = tpu.iota {dimensions = array<i32: 0>} : vector<4x32xi32>
    %c8_i32_9 = arith.constant 8 : i32
    %32 = vector.broadcast %c8_i32_9 : i32 to vector<4x32xi32>
    %33 = arith.muli %31, %32 : vector<4x32xi32>
    %34 = arith.cmpi sge, %30, %33 : vector<4x32xi32>
    %c1_i32_10 = arith.constant 1 : i32
    %35 = vector.broadcast %c1_i32_10 : i32 to vector<4x32xi32>
    %36 = arith.addi %31, %35 : vector<4x32xi32>
    %c8_i32_11 = arith.constant 8 : i32
    %37 = vector.broadcast %c8_i32_11 : i32 to vector<4x32xi32>
    %38 = arith.muli %36, %37 : vector<4x32xi32>
    %39 = arith.cmpi slt, %30, %38 : vector<4x32xi32>
    %40 = arith.andi %34, %39 : vector<4x32xi1>
    %41 = arith.extui %40 : vector<4x32xi1> to vector<4x32xi32>
    %42 = arith.sitofp %41 : vector<4x32xi32> to vector<4x32xf32>
    %43 = vector.shape_cast %12 : vector<8x2x32xf32> to vector<8x2x1x32xf32>
    %44 = vector.shape_cast %14 : vector<8x2x32xf32> to vector<8x1x2x32xf32>
    %45 = vector.broadcast %43 : vector<8x2x1x32xf32> to vector<8x2x2x32xf32>
    %46 = vector.broadcast %44 : vector<8x1x2x32xf32> to vector<8x2x2x32xf32>
    %47 = arith.mulf %45, %46 : vector<8x2x2x32xf32>
    %48 = vector.shape_cast %47 : vector<8x2x2x32xf32> to vector<32x32xf32>
    %cst_12 = arith.constant dense<0.000000e+00> : vector<32x4xf32>
    %49 = tpu.matmul %48, %29, %cst_12 {dimension_numbers = #tpu.dot_dimension_numbers<[1], [0], [0], [1], [0, 0, 1, 1], [], []>} : vector<32x32xf32>, vector<32x4xf32>, vector<32x4xf32> -> vector<32x4xf32>
    %50 = vector.shape_cast %49 : vector<32x4xf32> to vector<8x2x2x4xf32>
    %cst_13 = arith.constant 0.353553385 : f32
    %51 = vector.broadcast %cst_13 : f32 to vector<8x2x2x4xf32>
    %52 = arith.mulf %50, %51 : vector<8x2x2x4xf32>
    %cst_14 = arith.constant dense<0xFF800000> : vector<8x2x4xf32>
    %53 = vector.multi_reduction <maximumf>, %52, %cst_14 [2] : vector<8x2x2x4xf32> to vector<8x2x4xf32>
    %54 = vector.shape_cast %53 : vector<8x2x4xf32> to vector<8x2x1x4xf32>
    %55 = vector.broadcast %54 : vector<8x2x1x4xf32> to vector<8x2x2x4xf32>
    %56 = arith.subf %52, %55 : vector<8x2x2x4xf32>
    %57 = math.exp %56 : vector<8x2x2x4xf32>
    %cst_15 = arith.constant dense<0.000000e+00> : vector<8x2x4xf32>
    %58 = vector.multi_reduction <add>, %57, %cst_15 [2] : vector<8x2x2x4xf32> to vector<8x2x4xf32>
    %59 = vector.shape_cast %58 : vector<8x2x4xf32> to vector<8x2x1x4xf32>
    %60 = tpu.reciprocal %59 {approx = true} : vector<8x2x1x4xf32> -> vector<8x2x1x4xf32>
    %61 = vector.broadcast %60 : vector<8x2x1x4xf32> to vector<8x2x2x4xf32>
    %62 = arith.mulf %57, %61 : vector<8x2x2x4xf32>
    %63 = vector.shape_cast %62 : vector<8x2x2x4xf32> to vector<32x4xf32>
    %cst_16 = arith.constant dense<0.000000e+00> : vector<32x32xf32>
    %64 = tpu.matmul %63, %42, %cst_16 {dimension_numbers = #tpu.dot_dimension_numbers<[1], [0], [0], [1], [0, 0, 1, 1], [], []>} : vector<32x4xf32>, vector<4x32xf32>, vector<32x32xf32> -> vector<32x32xf32>
    %65 = vector.shape_cast %64 : vector<32x32xf32> to vector<8x2x2x32xf32>
    %66 = vector.shape_cast %16 : vector<8x2x32xf32> to vector<8x1x2x32xf32>
    %67 = vector.broadcast %66 : vector<8x1x2x32xf32> to vector<8x2x2x32xf32>
    %68 = arith.mulf %65, %67 : vector<8x2x2x32xf32>
    %cst_17 = arith.constant dense<0.000000e+00> : vector<8x2x32xf32>
    %69 = vector.multi_reduction <add>, %68, %cst_17 [2] : vector<8x2x2x32xf32> to vector<8x2x32xf32>
    %70 = vector.shape_cast %69 : vector<8x2x32xf32> to vector<16x32xf32>
    %c0_18 = arith.constant 0 : index
    %c0_19 = arith.constant 0 : index
    %c0_20 = arith.constant 0 : index
    %71 = vector.load %arg7[%c0_18, %c0_19, %c0_20] : memref<1x32x32xf32, #tpu.memory_space<vmem>>, vector<1x32x32xf32>
    %72 = vector.shape_cast %71 : vector<1x32x32xf32> to vector<32x32xf32>
    %cst_21 = arith.constant dense<0.000000e+00> : vector<16x32xf32>
    %73 = tpu.matmul %70, %72, %cst_21 {dimension_numbers = #tpu.dot_dimension_numbers<[1], [0], [0], [1], [0, 0, 1, 1], [], []>} : vector<16x32xf32>, vector<32x32xf32>, vector<16x32xf32> -> vector<16x32xf32>
    %c0_22 = arith.constant 0 : index
    %c0_23 = arith.constant 0 : index
    %c0_24 = arith.constant 0 : index
    %74 = vector.load %arg8[%c0_22, %c0_23, %c0_24] : memref<1x1x32xf32, #tpu.memory_space<vmem>>, vector<1x1x32xf32>
    %75 = vector.shape_cast %74 : vector<1x1x32xf32> to vector<1x32xf32>
    %76 = vector.broadcast %75 : vector<1x32xf32> to vector<16x32xf32>
    %77 = arith.addf %73, %76 : vector<16x32xf32>
    %78 = arith.addf %3, %77 : vector<16x32xf32>
    %cst_25 = arith.constant dense<0.000000e+00> : vector<32xf32>
    %79 = vector.multi_reduction <add>, %78, %cst_25 [0] : vector<16x32xf32> to vector<32xf32>
    %80 = vector.shape_cast %79 : vector<32xf32> to vector<1x32xf32>
    %cst_26 = arith.constant 1.600000e+01 : f32
    %81 = vector.broadcast %cst_26 : f32 to vector<1x32xf32>
    %82 = arith.divf %80, %81 : vector<1x32xf32>
    %83 = arith.mulf %78, %78 : vector<16x32xf32>
    %cst_27 = arith.constant dense<0.000000e+00> : vector<32xf32>
    %84 = vector.multi_reduction <add>, %83, %cst_27 [0] : vector<16x32xf32> to vector<32xf32>
    %85 = vector.shape_cast %84 : vector<32xf32> to vector<1x32xf32>
    %cst_28 = arith.constant 1.600000e+01 : f32
    %86 = vector.broadcast %cst_28 : f32 to vector<1x32xf32>
    %87 = arith.divf %85, %86 : vector<1x32xf32>
    %88 = arith.mulf %82, %82 : vector<1x32xf32>
    %89 = arith.subf %87, %88 : vector<1x32xf32>
    %cst_29 = arith.constant 0.000000e+00 : f32
    %90 = vector.broadcast %cst_29 : f32 to vector<1x32xf32>
    %91 = arith.maximumf %89, %90 : vector<1x32xf32>
    %92 = vector.broadcast %82 : vector<1x32xf32> to vector<16x32xf32>
    %93 = arith.subf %78, %92 : vector<16x32xf32>
    %cst_30 = arith.constant 9.99999974E-6 : f32
    %94 = vector.broadcast %cst_30 : f32 to vector<1x32xf32>
    %95 = arith.addf %91, %94 : vector<1x32xf32>
    %96 = math.rsqrt %95 : vector<1x32xf32>
    %97 = vector.broadcast %96 : vector<1x32xf32> to vector<16x32xf32>
    %98 = arith.mulf %93, %97 : vector<16x32xf32>
    %c0_31 = arith.constant 0 : index
    %c0_32 = arith.constant 0 : index
    %c0_33 = arith.constant 0 : index
    %99 = vector.load %arg13[%c0_31, %c0_32, %c0_33] : memref<1x1x32xf32, #tpu.memory_space<vmem>>, vector<1x1x32xf32>
    %100 = vector.shape_cast %99 : vector<1x1x32xf32> to vector<1x32xf32>
    %101 = vector.broadcast %100 : vector<1x32xf32> to vector<16x32xf32>
    %102 = arith.mulf %98, %101 : vector<16x32xf32>
    %c0_34 = arith.constant 0 : index
    %c0_35 = arith.constant 0 : index
    %c0_36 = arith.constant 0 : index
    %103 = vector.load %arg14[%c0_34, %c0_35, %c0_36] : memref<1x1x32xf32, #tpu.memory_space<vmem>>, vector<1x1x32xf32>
    %104 = vector.shape_cast %103 : vector<1x1x32xf32> to vector<1x32xf32>
    %105 = vector.broadcast %104 : vector<1x32xf32> to vector<16x32xf32>
    %106 = arith.addf %102, %105 : vector<16x32xf32>
    %c0_37 = arith.constant 0 : index
    %c0_38 = arith.constant 0 : index
    %c0_39 = arith.constant 0 : index
    %107 = vector.load %arg9[%c0_37, %c0_38, %c0_39] : memref<1x32x64xf32, #tpu.memory_space<vmem>>, vector<1x32x64xf32>
    %108 = vector.shape_cast %107 : vector<1x32x64xf32> to vector<32x64xf32>
    %cst_40 = arith.constant dense<0.000000e+00> : vector<16x64xf32>
    %109 = tpu.matmul %106, %108, %cst_40 {dimension_numbers = #tpu.dot_dimension_numbers<[1], [0], [0], [1], [0, 0, 1, 1], [], []>} : vector<16x32xf32>, vector<32x64xf32>, vector<16x64xf32> -> vector<16x64xf32>
    %c0_41 = arith.constant 0 : index
    %c0_42 = arith.constant 0 : index
    %c0_43 = arith.constant 0 : index
    %110 = vector.load %arg10[%c0_41, %c0_42, %c0_43] : memref<1x1x64xf32, #tpu.memory_space<vmem>>, vector<1x1x64xf32>
    %111 = vector.shape_cast %110 : vector<1x1x64xf32> to vector<1x64xf32>
    %112 = vector.broadcast %111 : vector<1x64xf32> to vector<16x64xf32>
    %113 = arith.addf %109, %112 : vector<16x64xf32>
    %cst_44 = arith.constant 5.000000e-01 : f32
    %114 = vector.broadcast %cst_44 : f32 to vector<16x64xf32>
    %115 = arith.mulf %114, %113 : vector<16x64xf32>
    %cst_45 = arith.constant 0.707106769 : f32
    %116 = vector.broadcast %cst_45 : f32 to vector<16x64xf32>
    %117 = arith.mulf %113, %116 : vector<16x64xf32>
    %118 = math.erf %117 : vector<16x64xf32>
    %cst_46 = arith.constant 1.000000e+00 : f32
    %119 = vector.broadcast %cst_46 : f32 to vector<16x64xf32>
    %120 = arith.addf %119, %118 : vector<16x64xf32>
    %121 = arith.mulf %115, %120 : vector<16x64xf32>
    %c0_47 = arith.constant 0 : index
    %c0_48 = arith.constant 0 : index
    %c0_49 = arith.constant 0 : index
    %122 = vector.load %arg11[%c0_47, %c0_48, %c0_49] : memref<1x64x32xf32, #tpu.memory_space<vmem>>, vector<1x64x32xf32>
    %123 = vector.shape_cast %122 : vector<1x64x32xf32> to vector<64x32xf32>
    %cst_50 = arith.constant dense<0.000000e+00> : vector<16x32xf32>
    %124 = tpu.matmul %121, %123, %cst_50 {dimension_numbers = #tpu.dot_dimension_numbers<[1], [0], [0], [1], [0, 0, 1, 1], [], []>} : vector<16x64xf32>, vector<64x32xf32>, vector<16x32xf32> -> vector<16x32xf32>
    %125 = arith.addf %106, %124 : vector<16x32xf32>
    %c0_51 = arith.constant 0 : index
    %c0_52 = arith.constant 0 : index
    %c0_53 = arith.constant 0 : index
    %126 = vector.load %arg12[%c0_51, %c0_52, %c0_53] : memref<1x1x32xf32, #tpu.memory_space<vmem>>, vector<1x1x32xf32>
    %127 = vector.shape_cast %126 : vector<1x1x32xf32> to vector<1x32xf32>
    %128 = vector.broadcast %127 : vector<1x32xf32> to vector<16x32xf32>
    %129 = arith.addf %125, %128 : vector<16x32xf32>
    %cst_54 = arith.constant dense<0.000000e+00> : vector<32xf32>
    %130 = vector.multi_reduction <add>, %129, %cst_54 [0] : vector<16x32xf32> to vector<32xf32>
    %131 = vector.shape_cast %130 : vector<32xf32> to vector<1x32xf32>
    %cst_55 = arith.constant 1.600000e+01 : f32
    %132 = vector.broadcast %cst_55 : f32 to vector<1x32xf32>
    %133 = arith.divf %131, %132 : vector<1x32xf32>
    %134 = arith.mulf %129, %129 : vector<16x32xf32>
    %cst_56 = arith.constant dense<0.000000e+00> : vector<32xf32>
    %135 = vector.multi_reduction <add>, %134, %cst_56 [0] : vector<16x32xf32> to vector<32xf32>
    %136 = vector.shape_cast %135 : vector<32xf32> to vector<1x32xf32>
    %cst_57 = arith.constant 1.600000e+01 : f32
    %137 = vector.broadcast %cst_57 : f32 to vector<1x32xf32>
    %138 = arith.divf %136, %137 : vector<1x32xf32>
    %139 = arith.mulf %133, %133 : vector<1x32xf32>
    %140 = arith.subf %138, %139 : vector<1x32xf32>
    %cst_58 = arith.constant 0.000000e+00 : f32
    %141 = vector.broadcast %cst_58 : f32 to vector<1x32xf32>
    %142 = arith.maximumf %140, %141 : vector<1x32xf32>
    %143 = vector.broadcast %133 : vector<1x32xf32> to vector<16x32xf32>
    %144 = arith.subf %129, %143 : vector<16x32xf32>
    %cst_59 = arith.constant 9.99999974E-6 : f32
    %145 = vector.broadcast %cst_59 : f32 to vector<1x32xf32>
    %146 = arith.addf %142, %145 : vector<1x32xf32>
    %147 = math.rsqrt %146 : vector<1x32xf32>
    %148 = vector.broadcast %147 : vector<1x32xf32> to vector<16x32xf32>
    %149 = arith.mulf %144, %148 : vector<16x32xf32>
    %c0_60 = arith.constant 0 : index
    %c0_61 = arith.constant 0 : index
    %c0_62 = arith.constant 0 : index
    %150 = vector.load %arg15[%c0_60, %c0_61, %c0_62] : memref<1x1x32xf32, #tpu.memory_space<vmem>>, vector<1x1x32xf32>
    %151 = vector.shape_cast %150 : vector<1x1x32xf32> to vector<1x32xf32>
    %152 = vector.broadcast %151 : vector<1x32xf32> to vector<16x32xf32>
    %153 = arith.mulf %149, %152 : vector<16x32xf32>
    %c0_63 = arith.constant 0 : index
    %c0_64 = arith.constant 0 : index
    %c0_65 = arith.constant 0 : index
    %154 = vector.load %arg16[%c0_63, %c0_64, %c0_65] : memref<1x1x32xf32, #tpu.memory_space<vmem>>, vector<1x1x32xf32>
    %155 = vector.shape_cast %154 : vector<1x1x32xf32> to vector<1x32xf32>
    %156 = vector.broadcast %155 : vector<1x32xf32> to vector<16x32xf32>
    %157 = arith.addf %153, %156 : vector<16x32xf32>
    %c0_66 = arith.constant 0 : index
    %c0_67 = arith.constant 0 : index
    %158 = vector.load %arg20[%c0_66, %c0_67] : memref<16x32xf32, #tpu.memory_space<vmem>>, vector<16x32xf32>
    tpu.vector_store %arg20[%c0_66, %c0_67], %157 {strides = array<i32>} : memref<16x32xf32, #tpu.memory_space<vmem>>, vector<16x32xf32>,
    %c1_i32_68 = arith.constant 1 : i32
    %159 = arith.cmpi eq, %arg0, %c1_i32_68 : i32
    %160 = arith.extui %159 : i1 to i32
    %c0_i32_69 = arith.constant 0 : i32
    %161 = arith.cmpi ne, %160, %c0_i32_69 : i32
    scf.if %161 {
      %cst_70 = arith.constant 5.000000e-01 : f32
      %162 = vector.broadcast %cst_70 : f32 to vector<16x32xf32>
      %163 = arith.mulf %162, %157 : vector<16x32xf32>
      %cst_71 = arith.constant 0.707106769 : f32
      %164 = vector.broadcast %cst_71 : f32 to vector<16x32xf32>
      %165 = arith.mulf %157, %164 : vector<16x32xf32>
      %166 = math.erf %165 : vector<16x32xf32>
      %cst_72 = arith.constant 1.000000e+00 : f32
      %167 = vector.broadcast %cst_72 : f32 to vector<16x32xf32>
      %168 = arith.addf %167, %166 : vector<16x32xf32>
      %169 = arith.mulf %163, %168 : vector<16x32xf32>
      %170 = vector.shape_cast %169 : vector<16x32xf32> to vector<8x2x32xf32>
      %c0_73 = arith.constant 0 : index
      %c0_74 = arith.constant 0 : index
      %c0_75 = arith.constant 0 : index
      %171 = vector.load %arg17[%c0_73, %c0_74, %c0_75] : memref<8x32x3xf32, #tpu.memory_space<vmem>>, vector<8x32x3xf32>
      "tpu.trace_start"() <{level = 10 : i32, message = "sbd,sdc->sbc"}> : () -> ()
      %cst_76 = arith.constant dense<0.000000e+00> : vector<8x2x3xf32>
      %172 = tpu.matmul %170, %171, %cst_76 {dimension_numbers = #tpu.dot_dimension_numbers<[2], [1], [1], [2], [0, 0, 0, 1, 1, 2], [0], [0]>} : vector<8x2x32xf32>, vector<8x32x3xf32>, vector<8x2x3xf32> -> vector<8x2x3xf32>
      "tpu.trace_stop"() : () -> ()
      %cst_77 = arith.constant dense<0.000000e+00> : vector<2x3xf32>
      %173 = vector.multi_reduction <add>, %172, %cst_77 [0] : vector<8x2x3xf32> to vector<2x3xf32>
      %c0_78 = arith.constant 0 : index
      %c0_79 = arith.constant 0 : index
      %174 = vector.load %arg18[%c0_78, %c0_79] : memref<1x3xf32, #tpu.memory_space<vmem>>, vector<1x3xf32>
      %175 = vector.broadcast %174 : vector<1x3xf32> to vector<2x3xf32>
      %176 = arith.addf %173, %175 : vector<2x3xf32>
      %c0_80 = arith.constant 0 : index
      %c0_81 = arith.constant 0 : index
      %177 = vector.load %arg19[%c0_80, %c0_81] : memref<2x3xf32, #tpu.memory_space<vmem>>, vector<2x3xf32>
      tpu.vector_store %arg19[%c0_80, %c0_81], %176 {strides = array<i32>} : memref<2x3xf32, #tpu.memory_space<vmem>>, vector<2x3xf32>,
    } else {
    }
    return
  }
  func.func @transform_0(%arg0: i32) -> (i32, i32, i32) {
    %c0_i32 = arith.constant 0 : i32
    %c0_i32_0 = arith.constant 0 : i32
    %c0_i32_1 = arith.constant 0 : i32
    %c0_i32_2 = arith.constant 0 : i32
    return %c0_i32, %c0_i32_0, %c0_i32_1 : i32, i32, i32
  }
  func.func @transform_1(%arg0: i32) -> (i32, i32) {
    %c0_i32 = arith.constant 0 : i32
    %c0_i32_0 = arith.constant 0 : i32
    %c0_i32_1 = arith.constant 0 : i32
    return %c0_i32, %c0_i32_0 : i32, i32
  }
  func.func @transform_2(%arg0: i32) -> (i32, i32) {
    %c0_i32 = arith.constant 0 : i32
    %c0_i32_0 = arith.constant 0 : i32
    %c0_i32_1 = arith.constant 0 : i32
    return %c0_i32, %c0_i32_0 : i32, i32
  }
  func.func @transform_3(%arg0: i32) -> (i32, i32) {
    %c0_i32 = arith.constant 0 : i32
    %c0_i32_0 = arith.constant 0 : i32
    %c0_i32_1 = arith.constant 0 : i32
    return %c0_i32, %c0_i32_0 : i32, i32
  }
  func.func @transform_4(%arg0: i32) -> (i32, i32, i32) {
    %c0_i32 = arith.constant 0 : i32
    %c0_i32_0 = arith.constant 0 : i32
    %c0_i32_1 = arith.constant 0 : i32
    return %arg0, %c0_i32, %c0_i32_0 : i32, i32, i32
  }
  func.func @transform_5(%arg0: i32) -> (i32, i32, i32) {
    %c0_i32 = arith.constant 0 : i32
    %c0_i32_0 = arith.constant 0 : i32
    %c0_i32_1 = arith.constant 0 : i32
    return %arg0, %c0_i32, %c0_i32_0 : i32, i32, i32
  }
  func.func @transform_6(%arg0: i32) -> (i32, i32, i32) {
    %c0_i32 = arith.constant 0 : i32
    %c0_i32_0 = arith.constant 0 : i32
    %c0_i32_1 = arith.constant 0 : i32
    return %arg0, %c0_i32, %c0_i32_0 : i32, i32, i32
  }
  func.func @transform_7(%arg0: i32) -> (i32, i32, i32) {
    %c0_i32 = arith.constant 0 : i32
    %c0_i32_0 = arith.constant 0 : i32
    %c0_i32_1 = arith.constant 0 : i32
    return %arg0, %c0_i32, %c0_i32_0 : i32, i32, i32
  }
  func.func @transform_8(%arg0: i32) -> (i32, i32, i32) {
    %c0_i32 = arith.constant 0 : i32
    %c0_i32_0 = arith.constant 0 : i32
    %c0_i32_1 = arith.constant 0 : i32
    return %arg0, %c0_i32, %c0_i32_0 : i32, i32, i32
  }
  func.func @transform_9(%arg0: i32) -> (i32, i32, i32) {
    %c0_i32 = arith.constant 0 : i32
    %c0_i32_0 = arith.constant 0 : i32
    %c0_i32_1 = arith.constant 0 : i32
    return %arg0, %c0_i32, %c0_i32_0 : i32, i32, i32
  }
  func.func @transform_10(%arg0: i32) -> (i32, i32, i32) {
    %c0_i32 = arith.constant 0 : i32
    %c0_i32_0 = arith.constant 0 : i32
    %c0_i32_1 = arith.constant 0 : i32
    return %arg0, %c0_i32, %c0_i32_0 : i32, i32, i32
  }
  func.func @transform_11(%arg0: i32) -> (i32, i32, i32) {
    %c0_i32 = arith.constant 0 : i32
    %c0_i32_0 = arith.constant 0 : i32
    %c0_i32_1 = arith.constant 0 : i32
    return %arg0, %c0_i32, %c0_i32_0 : i32, i32, i32
  }
  func.func @transform_12(%arg0: i32) -> (i32, i32, i32) {
    %c0_i32 = arith.constant 0 : i32
    %c0_i32_0 = arith.constant 0 : i32
    %c0_i32_1 = arith.constant 0 : i32
    return %arg0, %c0_i32, %c0_i32_0 : i32, i32, i32
  }
  func.func @transform_13(%arg0: i32) -> (i32, i32, i32) {
    %c0_i32 = arith.constant 0 : i32
    %c0_i32_0 = arith.constant 0 : i32
    %c0_i32_1 = arith.constant 0 : i32
    return %arg0, %c0_i32, %c0_i32_0 : i32, i32, i32
  }
  func.func @transform_14(%arg0: i32) -> (i32, i32, i32) {
    %c0_i32 = arith.constant 0 : i32
    %c0_i32_0 = arith.constant 0 : i32
    %c0_i32_1 = arith.constant 0 : i32
    return %arg0, %c0_i32, %c0_i32_0 : i32, i32, i32
  }
  func.func @transform_15(%arg0: i32) -> (i32, i32, i32) {
    %c0_i32 = arith.constant 0 : i32
    %c0_i32_0 = arith.constant 0 : i32
    %c0_i32_1 = arith.constant 0 : i32
    return %arg0, %c0_i32, %c0_i32_0 : i32, i32, i32
  }
  func.func @transform_16(%arg0: i32) -> (i32, i32, i32) {
    %c0_i32 = arith.constant 0 : i32
    %c0_i32_0 = arith.constant 0 : i32
    %c0_i32_1 = arith.constant 0 : i32
    %c0_i32_2 = arith.constant 0 : i32
    return %c0_i32, %c0_i32_0, %c0_i32_1 : i32, i32, i32
  }
  func.func @transform_17(%arg0: i32) -> (i32, i32) {
    %c0_i32 = arith.constant 0 : i32
    %c0_i32_0 = arith.constant 0 : i32
    %c0_i32_1 = arith.constant 0 : i32
    return %c0_i32, %c0_i32_0 : i32, i32
  }
  func.func @transform_18(%arg0: i32) -> (i32, i32) {
    %c0_i32 = arith.constant 0 : i32
    %c0_i32_0 = arith.constant 0 : i32
    %c0_i32_1 = arith.constant 0 : i32
    return %c0_i32, %c0_i32_0 : i32, i32
  }
}

</mosaic_0001>

<llo_original>
// kernel: tpu_custom_call.1
$region0: #{tpu_custom_call.1}
  #allocation0 [shape = 'u32[]', space=smem, size = 0x4, offset = 0x4, fixed_abs, tag = 'smem constant byte address 0x4 - core index']
  #allocation1 [shape = 'u32[72,128]{1,0:T(1,128)}', space=vmem, size = 0x9000, scoped, tag = 'internal scratch']
  #allocation2 [shape = 'f32[16,32]{1,0:T(8,128)}', space=vmem, size = 0x2000, scoped, tag = 'scratch operand']
  %s0 = inlined_call_operand.vmem [shape: f32[8,2,4], index: 0, kind: input, shape index: {}]
  %s1 = inlined_call_operand.vmem [shape: f32[4,32], index: 1, kind: input, shape index: {}]
  %s2 = inlined_call_operand.vmem [shape: f32[1,32], index: 2, kind: input, shape index: {}]
  %s3 = inlined_call_operand.vmem [shape: f32[8,32], index: 3, kind: input, shape index: {}]
  %s4 = inlined_call_operand.vmem [shape: f32[2,32,96], index: 4, kind: input, shape index: {}]
  %s5 = inlined_call_operand.vmem [shape: f32[2,1,96], index: 5, kind: input, shape index: {}]
  %s6 = inlined_call_operand.vmem [shape: f32[2,32,32], index: 6, kind: input, shape index: {}]
  %s7 = inlined_call_operand.vmem [shape: f32[2,1,32], index: 7, kind: input, shape index: {}]
  %s8 = inlined_call_operand.vmem [shape: f32[2,32,64], index: 8, kind: input, shape index: {}]
  %s9 = inlined_call_operand.vmem [shape: f32[2,1,64], index: 9, kind: input, shape index: {}]
  %s10 = inlined_call_operand.vmem [shape: f32[2,64,32], index: 10, kind: input, shape index: {}]
  %s11 = inlined_call_operand.vmem [shape: f32[2,1,32], index: 11, kind: input, shape index: {}]
  %s12 = inlined_call_operand.vmem [shape: f32[2,1,32], index: 12, kind: input, shape index: {}]
  %s13 = inlined_call_operand.vmem [shape: f32[2,1,32], index: 13, kind: input, shape index: {}]
  %s14 = inlined_call_operand.vmem [shape: f32[2,1,32], index: 14, kind: input, shape index: {}]
  %s15 = inlined_call_operand.vmem [shape: f32[2,1,32], index: 15, kind: input, shape index: {}]
  %s16 = inlined_call_operand.vmem [shape: f32[8,32,3], index: 16, kind: input, shape index: {}]
  %s17 = inlined_call_operand.vmem [shape: f32[1,3], index: 17, kind: input, shape index: {}]
  %s18 = inlined_call_operand.hbm [shape: f32[2,3], index: 18, kind: output, shape index: {}]
  %s19 = sld [smem:[#allocation0]]
  $region113: #{tpu_custom_call.1} parent=0
    _
  %s21 = ssub.s32 1, %s19
  %s22 = scalar_select 0, %s21, %s19
  $region1: #{tpu_custom_call.1} parent=0
    #allocation3 [shape = 'u8[1024]{0}', space=vmem, size = 0x400, scoped, tag = 'output window, operand 0, single buffered']
    #allocation4 [shape = 's32[2]{0}', space=sflag, size = 0x8, scoped, tag = 'scoped memory for tpu_custom_call.1']
    %23 = vsyncpa [#allocation4], 0
    loop: start=0, step=1, limit=4
    $region2: #{tpu_custom_call.1} parent=1 // loop_pre_header
      _
    $region3: #{tpu_custom_call.1} parent=1 // loop_header
      %s25 = sphi 0, %s29
      %p26 = scmp.ge.s32.totalorder %s25, 4
      %s33 = sphi 0, %s33
      %s35 = sphi 0, %s33
      %s36 = sphi 0, %s35
      %s50 = sphi 0, %s36
      %s54 = sphi 0, %s54
      %s56 = sphi 0, %s54
      %s57 = sphi 0, %s56
      %s71 = sphi 0, %s57
      %s75 = sphi 0, %s75
      %s77 = sphi 0, %s75
      %s78 = sphi 0, %s77
      %s92 = sphi 0, %s78
      %s96 = sphi 0, %s96
      %s98 = sphi 0, %s96
      %s99 = sphi 0, %s98
      %s113 = sphi 0, %s99
      %s119 = sphi 0, %s121
      %s122 = sphi 0, %s119
      %s123 = sphi 0, %s122
      %s139 = sphi 0, %s123
      %s145 = sphi 0, %s147
      %s148 = sphi 0, %s145
      %s149 = sphi 0, %s148
      %s165 = sphi 0, %s149
      %s171 = sphi 0, %s173
      %s174 = sphi 0, %s171
      %s175 = sphi 0, %s174
      %s191 = sphi 0, %s175
      %s197 = sphi 0, %s199
      %s200 = sphi 0, %s197
      %s201 = sphi 0, %s200
      %s217 = sphi 0, %s201
      %s223 = sphi 0, %s225
      %s226 = sphi 0, %s223
      %s227 = sphi 0, %s226
      %s243 = sphi 0, %s227
      %s249 = sphi 0, %s251
      %s252 = sphi 0, %s249
      %s253 = sphi 0, %s252
      %s269 = sphi 0, %s253
      %s275 = sphi 0, %s277
      %s278 = sphi 0, %s275
      %s279 = sphi 0, %s278
      %s295 = sphi 0, %s279
      %s301 = sphi 0, %s303
      %s304 = sphi 0, %s301
      %s305 = sphi 0, %s304
      %s321 = sphi 0, %s305
      %s327 = sphi 0, %s329
      %s330 = sphi 0, %s327
      %s331 = sphi 0, %s330
      %s347 = sphi 0, %s331
      %s353 = sphi 0, %s355
      %s356 = sphi 0, %s353
      %s357 = sphi 0, %s356
      %s373 = sphi 0, %s357
      %s379 = sphi 0, %s381
      %s382 = sphi 0, %s379
      %s383 = sphi 0, %s382
      %s399 = sphi 0, %s383
      %s405 = sphi 0, %s407
      %s408 = sphi 0, %s405
      %s409 = sphi 0, %s408
      %s425 = sphi 0, %s409
      %s429 = sphi 0, %s429
      %s431 = sphi 0, %s429
      %s432 = sphi 0, %s431
      %s446 = sphi 0, %s432
      %s450 = sphi 0, %s450
      %s452 = sphi 0, %s450
      %s453 = sphi 0, %s452
      %s467 = sphi 0, %s453
      %s471 = sphi 0, %s471
      %s473 = sphi 0, %s471
      %s474 = sphi 0, %s473
      %s488 = sphi 0, %s474
    $region4: #{tpu_custom_call.1} parent=1 // loop_header_branch
      %28 = sbr.rel (%p26) target = $region8
    $region5: #{tpu_custom_call.1} parent=1 // loop_body
      %s30 = ssub.s32 %s25, 1
      %s31 = ssub.s32 %s25, 2
      %s32 = sadd.s32 %s25, 1
      %s34 = sadd.s32 %s33, 1
      %p37 = scmp.eq.s32.totalorder %s25, 1
      %p38 = scmp.ne.s32.totalorder %s33, %s35
      %p39 = scmp.eq.s32.totalorder %s25, 0
      %p40 = por %p38, %p39
      %p41 = scmp.ne.s32.totalorder %s33, %s35
      %p42 = scmp.eq.s32.totalorder %s30, 1
      %p43 = por %p41, %p42
      %p44 = scmp.ne.s32.totalorder %s35, %s36
      %p45 = scmp.eq.s32.totalorder %s30, 0
      %p46 = por %p44, %p45
      %p47 = scmp.ne.s32.totalorder %s35, %s36
      %p48 = scmp.eq.s32.totalorder %s31, 1
      %p49 = por %p47, %p48
      %p51 = scmp.ne.s32.totalorder %s36, %s50
      %p52 = scmp.eq.s32.totalorder %s31, 0
      %p53 = por %p51, %p52
      %s55 = sadd.s32 %s54, 1
      %p58 = scmp.eq.s32.totalorder %s25, 1
      %p59 = scmp.ne.s32.totalorder %s54, %s56
      %p60 = scmp.eq.s32.totalorder %s25, 0
      %p61 = por %p59, %p60
      %p62 = scmp.ne.s32.totalorder %s54, %s56
      %p63 = scmp.eq.s32.totalorder %s30, 1
      %p64 = por %p62, %p63
      %p65 = scmp.ne.s32.totalorder %s56, %s57
      %p66 = scmp.eq.s32.totalorder %s30, 0
      %p67 = por %p65, %p66
      %p68 = scmp.ne.s32.totalorder %s56, %s57
      %p69 = scmp.eq.s32.totalorder %s31, 1
      %p70 = por %p68, %p69
      %p72 = scmp.ne.s32.totalorder %s57, %s71
      %p73 = scmp.eq.s32.totalorder %s31, 0
      %p74 = por %p72, %p73
      %s76 = sadd.s32 %s75, 1
      %p79 = scmp.eq.s32.totalorder %s25, 1
      %p80 = scmp.ne.s32.totalorder %s75, %s77
      %p81 = scmp.eq.s32.totalorder %s25, 0
      %p82 = por %p80, %p81
      %p83 = scmp.ne.s32.totalorder %s75, %s77
      %p84 = scmp.eq.s32.totalorder %s30, 1
      %p85 = por %p83, %p84
      %p86 = scmp.ne.s32.totalorder %s77, %s78
      %p87 = scmp.eq.s32.totalorder %s30, 0
      %p88 = por %p86, %p87
      %p89 = scmp.ne.s32.totalorder %s77, %s78
      %p90 = scmp.eq.s32.totalorder %s31, 1
      %p91 = por %p89, %p90
      %p93 = scmp.ne.s32.totalorder %s78, %s92
      %p94 = scmp.eq.s32.totalorder %s31, 0
      %p95 = por %p93, %p94
      %s97 = sadd.s32 %s96, 1
      %p100 = scmp.eq.s32.totalorder %s25, 1
      %p101 = scmp.ne.s32.totalorder %s96, %s98
      %p102 = scmp.eq.s32.totalorder %s25, 0
      %p103 = por %p101, %p102
      %p104 = scmp.ne.s32.totalorder %s96, %s98
      %p105 = scmp.eq.s32.totalorder %s30, 1
      %p106 = por %p104, %p105
      %p107 = scmp.ne.s32.totalorder %s98, %s99
      %p108 = scmp.eq.s32.totalorder %s30, 0
      %p109 = por %p107, %p108
      %p110 = scmp.ne.s32.totalorder %s98, %s99
      %p111 = scmp.eq.s32.totalorder %s31, 1
      %p112 = por %p110, %p111
      %p114 = scmp.ne.s32.totalorder %s99, %s113
      %p115 = scmp.eq.s32.totalorder %s31, 0
      %p116 = por %p114, %p115
      %s117 = ssub.s32 %s25, %s32
      %p118 = scmp.eq.s32.totalorder %s117, 0
      %s120 = sadd.s32 %s119, 1
      %s121 = scalar_select %p118, %s119, %s120
      %p124 = pneg %p118
      %p125 = scmp.eq.s32.totalorder %s25, 1
      %p126 = por %p124, %p125
      %p127 = scmp.ne.s32.totalorder %s119, %s122
      %p128 = scmp.eq.s32.totalorder %s25, 0
      %p129 = por %p127, %p128
      %p130 = scmp.ne.s32.totalorder %s119, %s122
      %p131 = scmp.eq.s32.totalorder %s30, 1
      %p132 = por %p130, %p131
      %p133 = scmp.ne.s32.totalorder %s122, %s123
      %p134 = scmp.eq.s32.totalorder %s30, 0
      %p135 = por %p133, %p134
      %p136 = scmp.ne.s32.totalorder %s122, %s123
      %p137 = scmp.eq.s32.totalorder %s31, 1
      %p138 = por %p136, %p137
      %p140 = scmp.ne.s32.totalorder %s123, %s139
      %p141 = scmp.eq.s32.totalorder %s31, 0
      %p142 = por %p140, %p141
      %s143 = ssub.s32 %s25, %s32
      %p144 = scmp.eq.s32.totalorder %s143, 0
      %s146 = sadd.s32 %s145, 1
      %s147 = scalar_select %p144, %s145, %s146
      %p150 = pneg %p144
      %p151 = scmp.eq.s32.totalorder %s25, 1
      %p152 = por %p150, %p151
      %p153 = scmp.ne.s32.totalorder %s145, %s148
      %p154 = scmp.eq.s32.totalorder %s25, 0
      %p155 = por %p153, %p154
      %p156 = scmp.ne.s32.totalorder %s145, %s148
      %p157 = scmp.eq.s32.totalorder %s30, 1
      %p158 = por %p156, %p157
      %p159 = scmp.ne.s32.totalorder %s148, %s149
      %p160 = scmp.eq.s32.totalorder %s30, 0
      %p161 = por %p159, %p160
      %p162 = scmp.ne.s32.totalorder %s148, %s149
      %p163 = scmp.eq.s32.totalorder %s31, 1
      %p164 = por %p162, %p163
      %p166 = scmp.ne.s32.totalorder %s149, %s165
      %p167 = scmp.eq.s32.totalorder %s31, 0
      %p168 = por %p166, %p167
      %s169 = ssub.s32 %s25, %s32
      %p170 = scmp.eq.s32.totalorder %s169, 0
      %s172 = sadd.s32 %s171, 1
      %s173 = scalar_select %p170, %s171, %s172
      %p176 = pneg %p170
      %p177 = scmp.eq.s32.totalorder %s25, 1
      %p178 = por %p176, %p177
      %p179 = scmp.ne.s32.totalorder %s171, %s174
      %p180 = scmp.eq.s32.totalorder %s25, 0
      %p181 = por %p179, %p180
      %p182 = scmp.ne.s32.totalorder %s171, %s174
      %p183 = scmp.eq.s32.totalorder %s30, 1
      %p184 = por %p182, %p183
      %p185 = scmp.ne.s32.totalorder %s174, %s175
      %p186 = scmp.eq.s32.totalorder %s30, 0
      %p187 = por %p185, %p186
      %p188 = scmp.ne.s32.totalorder %s174, %s175
      %p189 = scmp.eq.s32.totalorder %s31, 1
      %p190 = por %p188, %p189
      %p192 = scmp.ne.s32.totalorder %s175, %s191
      %p193 = scmp.eq.s32.totalorder %s31, 0
      %p194 = por %p192, %p193
      %s195 = ssub.s32 %s25, %s32
      %p196 = scmp.eq.s32.totalorder %s195, 0
      %s198 = sadd.s32 %s197, 1
      %s199 = scalar_select %p196, %s197, %s198
      %p202 = pneg %p196
      %p203 = scmp.eq.s32.totalorder %s25, 1
      %p204 = por %p202, %p203
      %p205 = scmp.ne.s32.totalorder %s197, %s200
      %p206 = scmp.eq.s32.totalorder %s25, 0
      %p207 = por %p205, %p206
      %p208 = scmp.ne.s32.totalorder %s197, %s200
      %p209 = scmp.eq.s32.totalorder %s30, 1
      %p210 = por %p208, %p209
      %p211 = scmp.ne.s32.totalorder %s200, %s201
      %p212 = scmp.eq.s32.totalorder %s30, 0
      %p213 = por %p211, %p212
      %p214 = scmp.ne.s32.totalorder %s200, %s201
      %p215 = scmp.eq.s32.totalorder %s31, 1
      %p216 = por %p214, %p215
      %p218 = scmp.ne.s32.totalorder %s201, %s217
      %p219 = scmp.eq.s32.totalorder %s31, 0
      %p220 = por %p218, %p219
      %s221 = ssub.s32 %s25, %s32
      %p222 = scmp.eq.s32.totalorder %s221, 0
      %s224 = sadd.s32 %s223, 1
      %s225 = scalar_select %p222, %s223, %s224
      %p228 = pneg %p222
      %p229 = scmp.eq.s32.totalorder %s25, 1
      %p230 = por %p228, %p229
      %p231 = scmp.ne.s32.totalorder %s223, %s226
      %p232 = scmp.eq.s32.totalorder %s25, 0
      %p233 = por %p231, %p232
      %p234 = scmp.ne.s32.totalorder %s223, %s226
      %p235 = scmp.eq.s32.totalorder %s30, 1
      %p236 = por %p234, %p235
      %p237 = scmp.ne.s32.totalorder %s226, %s227
      %p238 = scmp.eq.s32.totalorder %s30, 0
      %p239 = por %p237, %p238
      %p240 = scmp.ne.s32.totalorder %s226, %s227
      %p241 = scmp.eq.s32.totalorder %s31, 1
      %p242 = por %p240, %p241
      %p244 = scmp.ne.s32.totalorder %s227, %s243
      %p245 = scmp.eq.s32.totalorder %s31, 0
      %p246 = por %p244, %p245
      %s247 = ssub.s32 %s25, %s32
      %p248 = scmp.eq.s32.totalorder %s247, 0
      %s250 = sadd.s32 %s249, 1
      %s251 = scalar_select %p248, %s249, %s250
      %p254 = pneg %p248
      %p255 = scmp.eq.s32.totalorder %s25, 1
      %p256 = por %p254, %p255
      %p257 = scmp.ne.s32.totalorder %s249, %s252
      %p258 = scmp.eq.s32.totalorder %s25, 0
      %p259 = por %p257, %p258
      %p260 = scmp.ne.s32.totalorder %s249, %s252
      %p261 = scmp.eq.s32.totalorder %s30, 1
      %p262 = por %p260, %p261
      %p263 = scmp.ne.s32.totalorder %s252, %s253
      %p264 = scmp.eq.s32.totalorder %s30, 0
      %p265 = por %p263, %p264
      %p266 = scmp.ne.s32.totalorder %s252, %s253
      %p267 = scmp.eq.s32.totalorder %s31, 1
      %p268 = por %p266, %p267
      %p270 = scmp.ne.s32.totalorder %s253, %s269
      %p271 = scmp.eq.s32.totalorder %s31, 0
      %p272 = por %p270, %p271
      %s273 = ssub.s32 %s25, %s32
      %p274 = scmp.eq.s32.totalorder %s273, 0
      %s276 = sadd.s32 %s275, 1
      %s277 = scalar_select %p274, %s275, %s276
      %p280 = pneg %p274
      %p281 = scmp.eq.s32.totalorder %s25, 1
      %p282 = por %p280, %p281
      %p283 = scmp.ne.s32.totalorder %s275, %s278
      %p284 = scmp.eq.s32.totalorder %s25, 0
      %p285 = por %p283, %p284
      %p286 = scmp.ne.s32.totalorder %s275, %s278
      %p287 = scmp.eq.s32.totalorder %s30, 1
      %p288 = por %p286, %p287
      %p289 = scmp.ne.s32.totalorder %s278, %s279
      %p290 = scmp.eq.s32.totalorder %s30, 0
      %p291 = por %p289, %p290
      %p292 = scmp.ne.s32.totalorder %s278, %s279
      %p293 = scmp.eq.s32.totalorder %s31, 1
      %p294 = por %p292, %p293
      %p296 = scmp.ne.s32.totalorder %s279, %s295
      %p297 = scmp.eq.s32.totalorder %s31, 0
      %p298 = por %p296, %p297
      %s299 = ssub.s32 %s25, %s32
      %p300 = scmp.eq.s32.totalorder %s299, 0
      %s302 = sadd.s32 %s301, 1
      %s303 = scalar_select %p300, %s301, %s302
      %p306 = pneg %p300
      %p307 = scmp.eq.s32.totalorder %s25, 1
      %p308 = por %p306, %p307
      %p309 = scmp.ne.s32.totalorder %s301, %s304
      %p310 = scmp.eq.s32.totalorder %s25, 0
      %p311 = por %p309, %p310
      %p312 = scmp.ne.s32.totalorder %s301, %s304
      %p313 = scmp.eq.s32.totalorder %s30, 1
      %p314 = por %p312, %p313
      %p315 = scmp.ne.s32.totalorder %s304, %s305
      %p316 = scmp.eq.s32.totalorder %s30, 0
      %p317 = por %p315, %p316
      %p318 = scmp.ne.s32.totalorder %s304, %s305
      %p319 = scmp.eq.s32.totalorder %s31, 1
      %p320 = por %p318, %p319
      %p322 = scmp.ne.s32.totalorder %s305, %s321
      %p323 = scmp.eq.s32.totalorder %s31, 0
      %p324 = por %p322, %p323
      %s325 = ssub.s32 %s25, %s32
      %p326 = scmp.eq.s32.totalorder %s325, 0
      %s328 = sadd.s32 %s327, 1
      %s329 = scalar_select %p326, %s327, %s328
      %p332 = pneg %p326
      %p333 = scmp.eq.s32.totalorder %s25, 1
      %p334 = por %p332, %p333
      %p335 = scmp.ne.s32.totalorder %s327, %s330
      %p336 = scmp.eq.s32.totalorder %s25, 0
      %p337 = por %p335, %p336
      %p338 = scmp.ne.s32.totalorder %s327, %s330
      %p339 = scmp.eq.s32.totalorder %s30, 1
      %p340 = por %p338, %p339
      %p341 = scmp.ne.s32.totalorder %s330, %s331
      %p342 = scmp.eq.s32.totalorder %s30, 0
      %p343 = por %p341, %p342
      %p344 = scmp.ne.s32.totalorder %s330, %s331
      %p345 = scmp.eq.s32.totalorder %s31, 1
      %p346 = por %p344, %p345
      %p348 = scmp.ne.s32.totalorder %s331, %s347
      %p349 = scmp.eq.s32.totalorder %s31, 0
      %p350 = por %p348, %p349
      %s351 = ssub.s32 %s25, %s32
      %p352 = scmp.eq.s32.totalorder %s351, 0
      %s354 = sadd.s32 %s353, 1
      %s355 = scalar_select %p352, %s353, %s354
      %p358 = pneg %p352
      %p359 = scmp.eq.s32.totalorder %s25, 1
      %p360 = por %p358, %p359
      %p361 = scmp.ne.s32.totalorder %s353, %s356
      %p362 = scmp.eq.s32.totalorder %s25, 0
      %p363 = por %p361, %p362
      %p364 = scmp.ne.s32.totalorder %s353, %s356
      %p365 = scmp.eq.s32.totalorder %s30, 1
      %p366 = por %p364, %p365
      %p367 = scmp.ne.s32.totalorder %s356, %s357
      %p368 = scmp.eq.s32.totalorder %s30, 0
      %p369 = por %p367, %p368
      %p370 = scmp.ne.s32.totalorder %s356, %s357
      %p371 = scmp.eq.s32.totalorder %s31, 1
      %p372 = por %p370, %p371
      %p374 = scmp.ne.s32.totalorder %s357, %s373
      %p375 = scmp.eq.s32.totalorder %s31, 0
      %p376 = por %p374, %p375
      %s377 = ssub.s32 %s25, %s32
      %p378 = scmp.eq.s32.totalorder %s377, 0
      %s380 = sadd.s32 %s379, 1
      %s381 = scalar_select %p378, %s379, %s380
      %p384 = pneg %p378
      %p385 = scmp.eq.s32.totalorder %s25, 1
      %p386 = por %p384, %p385
      %p387 = scmp.ne.s32.totalorder %s379, %s382
      %p388 = scmp.eq.s32.totalorder %s25, 0
      %p389 = por %p387, %p388
      %p390 = scmp.ne.s32.totalorder %s379, %s382
      %p391 = scmp.eq.s32.totalorder %s30, 1
      %p392 = por %p390, %p391
      %p393 = scmp.ne.s32.totalorder %s382, %s383
      %p394 = scmp.eq.s32.totalorder %s30, 0
      %p395 = por %p393, %p394
      %p396 = scmp.ne.s32.totalorder %s382, %s383
      %p397 = scmp.eq.s32.totalorder %s31, 1
      %p398 = por %p396, %p397
      %p400 = scmp.ne.s32.totalorder %s383, %s399
      %p401 = scmp.eq.s32.totalorder %s31, 0
      %p402 = por %p400, %p401
      %s403 = ssub.s32 %s25, %s32
      %p404 = scmp.eq.s32.totalorder %s403, 0
      %s406 = sadd.s32 %s405, 1
      %s407 = scalar_select %p404, %s405, %s406
      %p410 = pneg %p404
      %p411 = scmp.eq.s32.totalorder %s25, 1
      %p412 = por %p410, %p411
      %p413 = scmp.ne.s32.totalorder %s405, %s408
      %p414 = scmp.eq.s32.totalorder %s25, 0
      %p415 = por %p413, %p414
      %p416 = scmp.ne.s32.totalorder %s405, %s408
      %p417 = scmp.eq.s32.totalorder %s30, 1
      %p418 = por %p416, %p417
      %p419 = scmp.ne.s32.totalorder %s408, %s409
      %p420 = scmp.eq.s32.totalorder %s30, 0
      %p421 = por %p419, %p420
      %p422 = scmp.ne.s32.totalorder %s408, %s409
      %p423 = scmp.eq.s32.totalorder %s31, 1
      %p424 = por %p422, %p423
      %p426 = scmp.ne.s32.totalorder %s409, %s425
      %p427 = scmp.eq.s32.totalorder %s31, 0
      %p428 = por %p426, %p427
      %s430 = sadd.s32 %s429, 1
      %p433 = scmp.eq.s32.totalorder %s25, 1
      %p434 = scmp.ne.s32.totalorder %s429, %s431
      %p435 = scmp.eq.s32.totalorder %s25, 0
      %p436 = por %p434, %p435
      %p437 = scmp.ne.s32.totalorder %s429, %s431
      %p438 = scmp.eq.s32.totalorder %s30, 1
      %p439 = por %p437, %p438
      %p440 = scmp.ne.s32.totalorder %s431, %s432
      %p441 = scmp.eq.s32.totalorder %s30, 0
      %p442 = por %p440, %p441
      %p443 = scmp.ne.s32.totalorder %s431, %s432
      %p444 = scmp.eq.s32.totalorder %s31, 1
      %p445 = por %p443, %p444
      %p447 = scmp.ne.s32.totalorder %s432, %s446
      %p448 = scmp.eq.s32.totalorder %s31, 0
      %p449 = por %p447, %p448
      %s451 = sadd.s32 %s450, 1
      %p454 = scmp.eq.s32.totalorder %s25, 1
      %p455 = scmp.ne.s32.totalorder %s450, %s452
      %p456 = scmp.eq.s32.totalorder %s25, 0
      %p457 = por %p455, %p456
      %p458 = scmp.ne.s32.totalorder %s450, %s452
      %p459 = scmp.eq.s32.totalorder %s30, 1
      %p460 = por %p458, %p459
      %p461 = scmp.ne.s32.totalorder %s452, %s453
      %p462 = scmp.eq.s32.totalorder %s30, 0
      %p463 = por %p461, %p462
      %p464 = scmp.ne.s32.totalorder %s452, %s453
      %p465 = scmp.eq.s32.totalorder %s31, 1
      %p466 = por %p464, %p465
      %p468 = scmp.ne.s32.totalorder %s453, %s467
      %p469 = scmp.eq.s32.totalorder %s31, 0
      %p470 = por %p468, %p469
      %s472 = sadd.s32 %s471, 1
      %p475 = scmp.eq.s32.totalorder %s25, 1
      %p476 = scmp.ne.s32.totalorder %s471, %s473
      %p477 = scmp.eq.s32.totalorder %s25, 0
      %p478 = por %p476, %p477
      %p479 = scmp.ne.s32.totalorder %s471, %s473
      %p480 = scmp.eq.s32.totalorder %s30, 1
      %p481 = por %p479, %p480
      %p482 = scmp.ne.s32.totalorder %s473, %s474
      %p483 = scmp.eq.s32.totalorder %s30, 0
      %p484 = por %p482, %p483
      %p485 = scmp.ne.s32.totalorder %s473, %s474
      %p486 = scmp.eq.s32.totalorder %s31, 1
      %p487 = por %p485, %p486
      %p489 = scmp.ne.s32.totalorder %s474, %s488
      %p490 = scmp.eq.s32.totalorder %s31, 0
      %p491 = por %p489, %p490
      %p492 = scmp.le.s32.totalorder 1, %s25
      %p493 = scmp.lt.s32.totalorder %s25, 3
      %p494 = pnand %p492, %p493
      %p495 = pneg %p494
      // Predicated region
      $region9: #{tpu_custom_call.1} parent=5 // pred_check
        _
      $region10: #{tpu_custom_call.1} parent=5 // pred_check_branch
        %497 = sbr.rel (%p494) target = $region12
      $region11: #{tpu_custom_call.1} parent=5 // pred_region
        %s498 = ssub.s32 %s25, 1
        // Predicated region
        $region13: #{tpu_custom_call.1} parent=11 // pred_check
          %p499 = pneg %p46
        $region14: #{tpu_custom_call.1} parent=11 // pred_check_branch
          %501 = sbr.rel (%p499) target = $region16
        $region15: #{tpu_custom_call.1} parent=11 // pred_region
          _
        $region16: #{tpu_custom_call.1} parent=11 // pred_fallthru
          _
        // Predicated region
        $region17: #{tpu_custom_call.1} parent=11 // pred_check
          %p502 = pneg %p67
        $region18: #{tpu_custom_call.1} parent=11 // pred_check_branch
          %504 = sbr.rel (%p502) target = $region20
        $region19: #{tpu_custom_call.1} parent=11 // pred_region
          _
        $region20: #{tpu_custom_call.1} parent=11 // pred_fallthru
          _
        // Predicated region
        $region21: #{tpu_custom_call.1} parent=11 // pred_check
          %p505 = pneg %p88
        $region22: #{tpu_custom_call.1} parent=11 // pred_check_branch
          %507 = sbr.rel (%p505) target = $region24
        $region23: #{tpu_custom_call.1} parent=11 // pred_region
          _
        $region24: #{tpu_custom_call.1} parent=11 // pred_fallthru
          _
        // Predicated region
        $region25: #{tpu_custom_call.1} parent=11 // pred_check
          %p508 = pneg %p109
        $region26: #{tpu_custom_call.1} parent=11 // pred_check_branch
          %510 = sbr.rel (%p508) target = $region28
        $region27: #{tpu_custom_call.1} parent=11 // pred_region
          _
        $region28: #{tpu_custom_call.1} parent=11 // pred_fallthru
          _
        // Predicated region
        $region29: #{tpu_custom_call.1} parent=11 // pred_check
          %p511 = pneg %p442
        $region30: #{tpu_custom_call.1} parent=11 // pred_check_branch
          %513 = sbr.rel (%p511) target = $region32
        $region31: #{tpu_custom_call.1} parent=11 // pred_region
          _
        $region32: #{tpu_custom_call.1} parent=11 // pred_fallthru
          _
        // Predicated region
        $region33: #{tpu_custom_call.1} parent=11 // pred_check
          %p514 = pneg %p463
        $region34: #{tpu_custom_call.1} parent=11 // pred_check_branch
          %516 = sbr.rel (%p514) target = $region36
        $region35: #{tpu_custom_call.1} parent=11 // pred_region
          _
        $region36: #{tpu_custom_call.1} parent=11 // pred_fallthru
          _
      $region12: #{tpu_custom_call.1} parent=5 // pred_fallthru
        _
      %p517 = scmp.lt.s32.totalorder %s25, 2
      // Predicated region
      $region37: #{tpu_custom_call.1} parent=5 // pred_check
        %p518 = pneg %p517
      $region38: #{tpu_custom_call.1} parent=5 // pred_check_branch
        %520 = sbr.rel (%p518) target = $region40
      $region39: #{tpu_custom_call.1} parent=5 // pred_region
        // Predicated region
        $region41: #{tpu_custom_call.1} parent=39 // pred_check
          %p521 = pneg %p129
        $region42: #{tpu_custom_call.1} parent=39 // pred_check_branch
          %523 = sbr.rel (%p521) target = $region44
        $region43: #{tpu_custom_call.1} parent=39 // pred_region
          %p524 = scmp.lt.s32.totalorder %s25, 1
          %s525 = scalar_select %p524, %s25, 1
          %s526 = smul.addr %s525, 4
          %s527 = smul.addr %s526, 8
          %s528 = scalar_lea.vmem %s4, %s527
        $region44: #{tpu_custom_call.1} parent=39 // pred_fallthru
          _
        // Predicated region
        $region45: #{tpu_custom_call.1} parent=39 // pred_check
          %p529 = pneg %p155
        $region46: #{tpu_custom_call.1} parent=39 // pred_check_branch
          %531 = sbr.rel (%p529) target = $region48
        $region47: #{tpu_custom_call.1} parent=39 // pred_region
          %p532 = scmp.lt.s32.totalorder %s25, 1
          %s533 = scalar_select %p532, %s25, 1
          %s534 = scalar_lea.vmem %s5, %s533
        $region48: #{tpu_custom_call.1} parent=39 // pred_fallthru
          _
        // Predicated region
        $region49: #{tpu_custom_call.1} parent=39 // pred_check
          %p535 = pneg %p181
        $region50: #{tpu_custom_call.1} parent=39 // pred_check_branch
          %537 = sbr.rel (%p535) target = $region52
        $region51: #{tpu_custom_call.1} parent=39 // pred_region
          %p538 = scmp.lt.s32.totalorder %s25, 1
          %s539 = scalar_select %p538, %s25, 1
          %s540 = smul.addr %s539, 4
          %s541 = smul.addr %s540, 8
          %s542 = scalar_lea.vmem %s6, %s541
        $region52: #{tpu_custom_call.1} parent=39 // pred_fallthru
          _
        // Predicated region
        $region53: #{tpu_custom_call.1} parent=39 // pred_check
          %p543 = pneg %p207
        $region54: #{tpu_custom_call.1} parent=39 // pred_check_branch
          %545 = sbr.rel (%p543) target = $region56
        $region55: #{tpu_custom_call.1} parent=39 // pred_region
          %p546 = scmp.lt.s32.totalorder %s25, 1
          %s547 = scalar_select %p546, %s25, 1
          %s548 = scalar_lea.vmem %s7, %s547
        $region56: #{tpu_custom_call.1} parent=39 // pred_fallthru
          _
        // Predicated region
        $region57: #{tpu_custom_call.1} parent=39 // pred_check
          %p549 = pneg %p233
        $region58: #{tpu_custom_call.1} parent=39 // pred_check_branch
          %551 = sbr.rel (%p549) target = $region60
        $region59: #{tpu_custom_call.1} parent=39 // pred_region
          %p552 = scmp.lt.s32.totalorder %s25, 1
          %s553 = scalar_select %p552, %s25, 1
          %s554 = smul.addr %s553, 4
          %s555 = smul.addr %s554, 8
          %s556 = scalar_lea.vmem %s8, %s555
        $region60: #{tpu_custom_call.1} parent=39 // pred_fallthru
          _
        // Predicated region
        $region61: #{tpu_custom_call.1} parent=39 // pred_check
          %p557 = pneg %p259
        $region62: #{tpu_custom_call.1} parent=39 // pred_check_branch
          %559 = sbr.rel (%p557) target = $region64
        $region63: #{tpu_custom_call.1} parent=39 // pred_region
          %p560 = scmp.lt.s32.totalorder %s25, 1
          %s561 = scalar_select %p560, %s25, 1
          %s562 = scalar_lea.vmem %s9, %s561
        $region64: #{tpu_custom_call.1} parent=39 // pred_fallthru
          _
        // Predicated region
        $region65: #{tpu_custom_call.1} parent=39 // pred_check
          %p563 = pneg %p285
        $region66: #{tpu_custom_call.1} parent=39 // pred_check_branch
          %565 = sbr.rel (%p563) target = $region68
        $region67: #{tpu_custom_call.1} parent=39 // pred_region
          %p566 = scmp.lt.s32.totalorder %s25, 1
          %s567 = scalar_select %p566, %s25, 1
          %s568 = smul.addr %s567, 8
          %s569 = smul.addr %s568, 8
          %s570 = scalar_lea.vmem %s10, %s569
        $region68: #{tpu_custom_call.1} parent=39 // pred_fallthru
          _
        // Predicated region
        $region69: #{tpu_custom_call.1} parent=39 // pred_check
          %p571 = pneg %p311
        $region70: #{tpu_custom_call.1} parent=39 // pred_check_branch
          %573 = sbr.rel (%p571) target = $region72
        $region71: #{tpu_custom_call.1} parent=39 // pred_region
          %p574 = scmp.lt.s32.totalorder %s25, 1
          %s575 = scalar_select %p574, %s25, 1
          %s576 = scalar_lea.vmem %s11, %s575
        $region72: #{tpu_custom_call.1} parent=39 // pred_fallthru
          _
        // Predicated region
        $region73: #{tpu_custom_call.1} parent=39 // pred_check
          %p577 = pneg %p337
        $region74: #{tpu_custom_call.1} parent=39 // pred_check_branch
          %579 = sbr.rel (%p577) target = $region76
        $region75: #{tpu_custom_call.1} parent=39 // pred_region
          %p580 = scmp.lt.s32.totalorder %s25, 1
          %s581 = scalar_select %p580, %s25, 1
          %s582 = scalar_lea.vmem %s12, %s581
        $region76: #{tpu_custom_call.1} parent=39 // pred_fallthru
          _
        // Predicated region
        $region77: #{tpu_custom_call.1} parent=39 // pred_check
          %p583 = pneg %p363
        $region78: #{tpu_custom_call.1} parent=39 // pred_check_branch
          %585 = sbr.rel (%p583) target = $region80
        $region79: #{tpu_custom_call.1} parent=39 // pred_region
          %p586 = scmp.lt.s32.totalorder %s25, 1
          %s587 = scalar_select %p586, %s25, 1
          %s588 = scalar_lea.vmem %s13, %s587
        $region80: #{tpu_custom_call.1} parent=39 // pred_fallthru
          _
        // Predicated region
        $region81: #{tpu_custom_call.1} parent=39 // pred_check
          %p589 = pneg %p389
        $region82: #{tpu_custom_call.1} parent=39 // pred_check_branch
          %591 = sbr.rel (%p589) target = $region84
        $region83: #{tpu_custom_call.1} parent=39 // pred_region
          %p592 = scmp.lt.s32.totalorder %s25, 1
          %s593 = scalar_select %p592, %s25, 1
          %s594 = scalar_lea.vmem %s14, %s593
        $region84: #{tpu_custom_call.1} parent=39 // pred_fallthru
          _
        // Predicated region
        $region85: #{tpu_custom_call.1} parent=39 // pred_check
          %p595 = pneg %p415
        $region86: #{tpu_custom_call.1} parent=39 // pred_check_branch
          %597 = sbr.rel (%p595) target = $region88
        $region87: #{tpu_custom_call.1} parent=39 // pred_region
          %p598 = scmp.lt.s32.totalorder %s25, 1
          %s599 = scalar_select %p598, %s25, 1
          %s600 = scalar_lea.vmem %s15, %s599
        $region88: #{tpu_custom_call.1} parent=39 // pred_fallthru
          _
      $region40: #{tpu_custom_call.1} parent=5 // pred_fallthru
        _
      %p601 = scmp.le.s32.totalorder 1, %s25
      %p602 = scmp.lt.s32.totalorder %s25, 3
      %p603 = pnand %p601, %p602
      %p604 = pneg %p603
      // Predicated region
      $region89: #{tpu_custom_call.1} parent=5 // pred_check
        _
      $region90: #{tpu_custom_call.1} parent=5 // pred_check_branch
        %606 = sbr.rel (%p603) target = $region92
      $region91: #{tpu_custom_call.1} parent=5 // pred_region
        %s607 = ssub.s32 %s25, 1
        %p608 = pneg %p46
        %p609 = pneg %p43
        %p610 = pneg %p67
        %p611 = pneg %p64
        %p612 = pneg %p88
        %p613 = pneg %p85
        %p614 = pneg %p109
        %p615 = pneg %p106
        %p616 = scmp.lt.s32.totalorder %s30, 1
        %s617 = scalar_select %p616, %s30, 1
        %s618 = smul.addr %s617, 4
        %s619 = smul.addr %s618, 8
        %s620 = scalar_lea.vmem %s4, %s619
        %p621 = pneg %p135
        %p622 = pneg %p132
        %p623 = scmp.lt.s32.totalorder %s30, 1
        %s624 = scalar_select %p623, %s30, 1
        %s625 = scalar_lea.vmem %s5, %s624
        %p626 = pneg %p161
        %p627 = pneg %p158
        %p628 = scmp.lt.s32.totalorder %s30, 1
        %s629 = scalar_select %p628, %s30, 1
        %s630 = smul.addr %s629, 4
        %s631 = smul.addr %s630, 8
        %s632 = scalar_lea.vmem %s6, %s631
        %p633 = pneg %p187
        %p634 = pneg %p184
        %p635 = scmp.lt.s32.totalorder %s30, 1
        %s636 = scalar_select %p635, %s30, 1
        %s637 = scalar_lea.vmem %s7, %s636
        %p638 = pneg %p213
        %p639 = pneg %p210
        %p640 = scmp.lt.s32.totalorder %s30, 1
        %s641 = scalar_select %p640, %s30, 1
        %s642 = smul.addr %s641, 4
        %s643 = smul.addr %s642, 8
        %s644 = scalar_lea.vmem %s8, %s643
        %p645 = pneg %p239
        %p646 = pneg %p236
        %p647 = scmp.lt.s32.totalorder %s30, 1
        %s648 = scalar_select %p647, %s30, 1
        %s649 = scalar_lea.vmem %s9, %s648
        %p650 = pneg %p265
        %p651 = pneg %p262
        %p652 = scmp.lt.s32.totalorder %s30, 1
        %s653 = scalar_select %p652, %s30, 1
        %s654 = smul.addr %s653, 8
        %s655 = smul.addr %s654, 8
        %s656 = scalar_lea.vmem %s10, %s655
        %p657 = pneg %p291
        %p658 = pneg %p288
        %p659 = scmp.lt.s32.totalorder %s30, 1
        %s660 = scalar_select %p659, %s30, 1
        %s661 = scalar_lea.vmem %s11, %s660
        %p662 = pneg %p317
        %p663 = pneg %p314
        %p664 = scmp.lt.s32.totalorder %s30, 1
        %s665 = scalar_select %p664, %s30, 1
        %s666 = scalar_lea.vmem %s12, %s665
        %p667 = pneg %p343
        %p668 = pneg %p340
        %p669 = scmp.lt.s32.totalorder %s30, 1
        %s670 = scalar_select %p669, %s30, 1
        %s671 = scalar_lea.vmem %s13, %s670
        %p672 = pneg %p369
        %p673 = pneg %p366
        %p674 = scmp.lt.s32.totalorder %s30, 1
        %s675 = scalar_select %p674, %s30, 1
        %s676 = scalar_lea.vmem %s14, %s675
        %p677 = pneg %p395
        %p678 = pneg %p392
        %p679 = scmp.lt.s32.totalorder %s30, 1
        %s680 = scalar_select %p679, %s30, 1
        %s681 = scalar_lea.vmem %s15, %s680
        %p682 = pneg %p421
        %p683 = pneg %p418
        %p684 = pneg %p442
        %p685 = pneg %p439
        %p686 = pneg %p463
        %p687 = pneg %p460
        %p688 = pneg %p484
        %p689 = pneg %p481
        %p690 = scmp.lt.s32.totalorder %s30, 1
        %s691 = scalar_select %p690, %s30, 1
        %s692 = smul.addr %s691, 4
        %s693 = smul.addr %s692, 8
        %s694 = scalar_lea.vmem %s4, %s693
        %p695 = scmp.lt.s32.totalorder %s30, 1
        %s696 = scalar_select %p695, %s30, 1
        %s697 = scalar_lea.vmem %s5, %s696
        %p698 = scmp.lt.s32.totalorder %s30, 1
        %s699 = scalar_select %p698, %s30, 1
        %s700 = smul.addr %s699, 4
        %s701 = smul.addr %s700, 8
        %s702 = scalar_lea.vmem %s6, %s701
        %p703 = scmp.lt.s32.totalorder %s30, 1
        %s704 = scalar_select %p703, %s30, 1
        %s705 = scalar_lea.vmem %s7, %s704
        %p706 = scmp.lt.s32.totalorder %s30, 1
        %s707 = scalar_select %p706, %s30, 1
        %s708 = smul.addr %s707, 4
        %s709 = smul.addr %s708, 8
        %s710 = scalar_lea.vmem %s8, %s709
        %p711 = scmp.lt.s32.totalorder %s30, 1
        %s712 = scalar_select %p711, %s30, 1
        %s713 = scalar_lea.vmem %s9, %s712
        %p714 = scmp.lt.s32.totalorder %s30, 1
        %s715 = scalar_select %p714, %s30, 1
        %s716 = smul.addr %s715, 8
        %s717 = smul.addr %s716, 8
        %s718 = scalar_lea.vmem %s10, %s717
        %p719 = scmp.lt.s32.totalorder %s30, 1
        %s720 = scalar_select %p719, %s30, 1
        %s721 = scalar_lea.vmem %s11, %s720
        %p722 = scmp.lt.s32.totalorder %s30, 1
        %s723 = scalar_select %p722, %s30, 1
        %s724 = scalar_lea.vmem %s12, %s723
        %p725 = scmp.lt.s32.totalorder %s30, 1
        %s726 = scalar_select %p725, %s30, 1
        %s727 = scalar_lea.vmem %s13, %s726
        %p728 = scmp.lt.s32.totalorder %s30, 1
        %s729 = scalar_select %p728, %s30, 1
        %s730 = scalar_lea.vmem %s14, %s729
        %p731 = scmp.lt.s32.totalorder %s30, 1
        %s732 = scalar_select %p731, %s30, 1
        %s733 = scalar_lea.vmem %s15, %s732
        %p734 = scmp.eq.s32.totalorder %s30, 0
        // Predicated region
        $region93: #{tpu_custom_call.1} parent=91 // pred_check
          %p735 = pneg %p734
        $region94: #{tpu_custom_call.1} parent=91 // pred_check_branch
          %737 = sbr.rel (%p735) target = $region96
        $region95: #{tpu_custom_call.1} parent=91 // pred_region
          %v738 = vld [vmem:[%s0] sm:$0x3]
          %v739 = vld [vmem:[%s0 + $0x2] sm:$0x3]
          %v740 = vld [vmem:[%s0 + $0x4] sm:$0x3]
          %v741 = vld [vmem:[%s0 + $0x6] sm:$0x3]
          %v742 = vld [vmem:[%s0 + $0x8] sm:$0x3]
          %v743 = vld [vmem:[%s0 + $0xa] sm:$0x3]
          %v744 = vld [vmem:[%s0 + $0xc] sm:$0x3]
          %v745 = vld [vmem:[%s0 + $0xe] sm:$0x3]
          %v746 = vld [vmem:[%s1] sm:$0xf]
          %v747 = vld [vmem:[%s2] sm:$0x1]
          %v749 = vperm.slane %v747, 0
          %759 = vst [vmem:[#allocation1] ss:$4 sm:$0xff] %v738
          %s760 = scalar_lea.vmem [#allocation1], 1
          %761 = vst [vmem:[%s760] ss:$4 sm:$0xff] %v739
          %s762 = scalar_lea.vmem [#allocation1], 2
          %763 = vst [vmem:[%s762] ss:$4 sm:$0xff] %v740
          %s764 = scalar_lea.vmem [#allocation1], 3
          %765 = vst [vmem:[%s764] ss:$4 sm:$0xff] %v741
          %s766 = scalar_lea.vmem [#allocation1], 32
          %767 = vst [vmem:[%s766] ss:$4 sm:$0xff] %v742
          %s768 = scalar_lea.vmem [#allocation1], 33
          %769 = vst [vmem:[%s768] ss:$4 sm:$0xff] %v743
          %s770 = scalar_lea.vmem [#allocation1], 34
          %771 = vst [vmem:[%s770] ss:$4 sm:$0xff] %v744
          %s772 = scalar_lea.vmem [#allocation1], 35
          %773 = vst [vmem:[%s772] ss:$4 sm:$0xff] %v745
          %v774 = vld.sshfl [vmem:[#allocation1] sm:$0xff pattern:$0x73625140]
          %v775 = vld.sshfl [vmem:[#allocation1 + $0x20] sm:$0xff pattern:$0x73625140]
          %vm776 = vcmask 31744
          %v777 = vsel %vm776, %v774, 0
          %v779 = vsel %vm776, %v775, 0
          %vm781 = vcmask 1043456
          %v783 = vsel %vm781, %v746, 0
          %785 = vmatpush.msra.mxu0 0.0
          %786 = vmatpush.msra.mxu0 0.0
          %787 = vmatpush.msra.mxu0 0.0
          %788 = vmatpush.msra.mxu0 0.0
          %789 = vmatpush.msra.mxu0 0.0
          %790 = vmatpush.msra.mxu0 0.0
          %791 = vmatpush.msra.mxu0 0.0
          %792 = vmatpush.msra.mxu0 0.0
          %793 = vmatpush.msra.mxu0 0.0
          %794 = vmatpush.msra.mxu0 0.0
          %795 = vmatpush.msra.mxu0 0.0
          %796 = vmatpush.msra.mxu0 0.0
          %797 = vmatpush.msra.mxu0 0.0
          %798 = vmatpush.msra.mxu0 0.0
          %799 = vmatpush.msra.mxu0 0.0
          %800 = vmatpush.msra.mxu0 %v783
          %801 = vmatmul.f32.gmra.mxu0 %v777
          %v802 = vpop.f32.mrf.mxu0
          %v803 = vadd.f32 %v749, %v802
          %804 = vmatmul.f32.gmra.mxu0 %v779
          %v805 = vpop.f32.mrf.mxu0
          %v806 = vadd.f32 %v749, %v805
          %807 = vdwg.mxu0
          %v808 = vmul.f32 %v803, 5.656854
          %v809 = vmul.f32 %v806, 5.656854
          %v812 = vrot.slane %v808, 2
          %v813 = vrot.slane %v808, 4
          %v814 = vrot.slane %v808, 6
          %v815 = vrot.slane %v809, 2
          %v816 = vrot.slane %v809, 4
          %v817 = vrot.slane %v809, 6
          %v824 = vld [vmem:[%s3] sm:$0xff]
          %v826 = vrot.slane %v824, 1
          %v827 = vrot.slane %v824, 2
          %v828 = vrot.slane %v824, 3
          %v829 = vrot.slane %v824, 4
          %v830 = vrot.slane %v824, 5
          %v831 = vrot.slane %v824, 6
          %v832 = vrot.slane %v824, 7
          %v833 = vperm.slane %v824, 0
          %v834 = vperm.slane %v826, 0
          %v835 = vperm.slane %v827, 0
          %v836 = vperm.slane %v828, 0
          %v837 = vperm.slane %v829, 0
          %v838 = vperm.slane %v830, 0
          %v839 = vperm.slane %v831, 0
          %v840 = vperm.slane %v832, 0
          %v849 = vadd.f32 %v808, %v833
          %v850 = vadd.f32 %v812, %v834
          %v851 = vadd.f32 %v813, %v835
          %v852 = vadd.f32 %v814, %v836
          %v853 = vadd.f32 %v809, %v837
          %v854 = vadd.f32 %v815, %v838
          %v855 = vadd.f32 %v816, %v839
          %v856 = vadd.f32 %v817, %v840
          %865 = vst [vmem:[#allocation1] ss:$4 sm:$0xff] %v849
          %s866 = scalar_lea.vmem [#allocation1], 1
          %867 = vst [vmem:[%s866] ss:$4 sm:$0xff] %v850
          %s868 = scalar_lea.vmem [#allocation1], 2
          %869 = vst [vmem:[%s868] ss:$4 sm:$0xff] %v851
          %s870 = scalar_lea.vmem [#allocation1], 3
          %871 = vst [vmem:[%s870] ss:$4 sm:$0xff] %v852
          %s872 = scalar_lea.vmem [#allocation1], 32
          %873 = vst [vmem:[%s872] ss:$4 sm:$0xff] %v853
          %s874 = scalar_lea.vmem [#allocation1], 33
          %875 = vst [vmem:[%s874] ss:$4 sm:$0xff] %v854
          %s876 = scalar_lea.vmem [#allocation1], 34
          %877 = vst [vmem:[%s876] ss:$4 sm:$0xff] %v855
          %s878 = scalar_lea.vmem [#allocation1], 35
          %879 = vst [vmem:[%s878] ss:$4 sm:$0xff] %v856
          %v880 = vld.sshfl [vmem:[#allocation1] sm:$0xff pattern:$0x73625140]
          %v881 = vld.sshfl [vmem:[#allocation1 + $0x20] sm:$0xff pattern:$0x73625140]
          %vm884 = vcmask 261120
          %885 = vst.msk [vmem:[#allocation2] sm:$0xff] %vm884, %v880
          %886 = vst.msk [vmem:[#allocation2 + $0x8] sm:$0xff] %vm884, %v881
        $region96: #{tpu_custom_call.1} parent=91 // pred_fallthru
          _
        %v887 = vld [vmem:[#allocation2] sm:$0xff]
        %v888 = vld [vmem:[#allocation2 + $0x8] sm:$0xff]
        %v889 = vld [vmem:[%s694] sm:$0xff]
        %v890 = vld [vmem:[%s694 + $0x8] sm:$0xff]
        %v891 = vld [vmem:[%s694 + $0x10] sm:$0xff]
        %v892 = vld [vmem:[%s694 + $0x18] sm:$0xff]
        %v893 = vld [vmem:[%s697] sm:$0x1]
        %v895 = vperm.slane %v893, 0
        %vm897 = vcmask 261120
        %v899 = vsel %vm897, %v887, 0
        %v902 = vsel %vm897, %v888, 0
        %904 = vmatpush.msra.mxu0 0.0
        %905 = vmatpush.msra.mxu0 0.0
        %906 = vmatpush.msra.mxu0 0.0
        %907 = vmatpush.msra.mxu0 0.0
        %908 = vmatpush.msra.mxu0 0.0
        %909 = vmatpush.msra.mxu0 0.0
        %910 = vmatpush.msra.mxu0 0.0
        %911 = vmatpush.msra.mxu0 0.0
        %912 = vmatpush.msra.mxu0 0.0
        %913 = vmatpush.msra.mxu0 0.0
        %914 = vmatpush.msra.mxu0 0.0
        %915 = vmatpush.msra.mxu0 0.0
        %916 = vmatpush.msra.mxu0 %v892
        %917 = vmatpush.msra.mxu0 %v891
        %918 = vmatpush.msra.mxu0 %v890
        %919 = vmatpush.msra.mxu0 %v889
        %920 = vmatmul.f32.gmra.mxu0 %v899
        %v921 = vpop.f32.mrf.mxu0
        %v922 = vadd.f32 %v895, %v921
        %923 = vmatmul.f32.gmra.mxu0 %v902
        %v924 = vpop.f32.mrf.mxu0
        %v925 = vadd.f32 %v895, %v924
        %926 = vdwg.mxu0
        %v927 = vlaneseq
        %v928 = vshrl.u32 %v927, 7
        %v929 = vadd.s32 %v928, 8
        %v930 = vadd.s32 %v928, 16
        %v931 = vadd.s32 %v928, 24
        %v932 = vlaneseq
        %v933 = vand.u32 %v932, 127
        %v934 = vmul.u32 %v933, 8
        %vm935 = vcmp.ge.s32.totalorder %v928, %v934
        %vm936 = vcmp.ge.s32.totalorder %v929, %v934
        %vm937 = vcmp.ge.s32.totalorder %v930, %v934
        %vm938 = vcmp.ge.s32.totalorder %v931, %v934
        %v939 = vadd.s32 %v933, 1
        %v940 = vmul.u32 %v939, 8
        %vm941 = vcmp.lt.s32.totalorder %v928, %v940
        %vm942 = vcmp.lt.s32.totalorder %v929, %v940
        %vm943 = vcmp.lt.s32.totalorder %v930, %v940
        %vm944 = vcmp.lt.s32.totalorder %v931, %v940
        %vm945 = vmand %vm935, %vm941
        %vm946 = vmand %vm936, %vm942
        %vm947 = vmand %vm937, %vm943
        %vm948 = vmand %vm938, %vm944
        %v949 = vsel %vm945, 1, 0
        %v950 = vsel %vm946, 1, 0
        %v951 = vsel %vm947, 1, 0
        %v952 = vsel %vm948, 1, 0
        %v953 = vcvt.s32.f32 %v949
        %v954 = vcvt.s32.f32 %v950
        %v955 = vcvt.s32.f32 %v951
        %v956 = vcvt.s32.f32 %v952
        %v957 = vmul.u32 %v928, 8
        %vm958 = vcmp.ge.s32.totalorder %v933, %v957
        %v959 = vadd.s32 %v928, 1
        %v960 = vmul.u32 %v959, 8
        %vm961 = vcmp.lt.s32.totalorder %v933, %v960
        %vm962 = vmand %vm958, %vm961
        %v963 = vsel %vm962, 1, 0
        %v964 = vcvt.s32.f32 %v963
        %v967 = vrot.slane %v922, 1
        %v968 = vrot.slane %v922, 2
        %v969 = vrot.slane %v922, 3
        %v970 = vrot.slane %v922, 4
        %v971 = vrot.slane %v922, 5
        %v972 = vrot.slane %v922, 6
        %v973 = vrot.slane %v922, 7
        %v974 = vrot.slane %v925, 1
        %v975 = vrot.slane %v925, 2
        %v976 = vrot.slane %v925, 3
        %v977 = vrot.slane %v925, 4
        %v978 = vrot.slane %v925, 5
        %v979 = vrot.slane %v925, 6
        %v980 = vrot.slane %v925, 7
        %v981 = vperm.slane %v922, 0
        %v982 = vperm.slane %v967, 0
        %v983 = vperm.slane %v968, 0
        %v984 = vperm.slane %v969, 0
        %v985 = vperm.slane %v970, 0
        %v986 = vperm.slane %v971, 0
        %v987 = vperm.slane %v972, 0
        %v988 = vperm.slane %v973, 0
        %v989 = vperm.slane %v925, 0
        %v990 = vperm.slane %v974, 0
        %v991 = vperm.slane %v975, 0
        %v992 = vperm.slane %v976, 0
        %v993 = vperm.slane %v977, 0
        %v994 = vperm.slane %v978, 0
        %v995 = vperm.slane %v979, 0
        %v996 = vperm.slane %v980, 0
        %1013 = vst [vmem:[#allocation1] ss:$4 sm:$0xff] %v922
        %v1014 = vld.sshfl [vmem:[#allocation1] sm:$0xff pattern:$0x73625140]
        %s1015 = scalar_lea.vmem [#allocation1], 32
        %1016 = vst [vmem:[%s1015] ss:$4 sm:$0xff] %v922
        %v1017 = vld.sshfl [vmem:[#allocation1 + $0x20] sm:$0xff pattern:$0x73625140]
        %1018 = vst [vmem:[#allocation1] ss:$4 sm:$0xff] %v968
        %v1019 = vld.sshfl [vmem:[#allocation1] sm:$0xff pattern:$0x73625140]
        %1020 = vst [vmem:[%s1015] ss:$4 sm:$0xff] %v968
        %v1021 = vld.sshfl [vmem:[#allocation1 + $0x20] sm:$0xff pattern:$0x73625140]
        %1022 = vst [vmem:[#allocation1] ss:$4 sm:$0xff] %v970
        %v1023 = vld.sshfl [vmem:[#allocation1] sm:$0xff pattern:$0x73625140]
        %1024 = vst [vmem:[%s1015] ss:$4 sm:$0xff] %v970
        %v1025 = vld.sshfl [vmem:[#allocation1 + $0x20] sm:$0xff pattern:$0x73625140]
        %1026 = vst [vmem:[#allocation1] ss:$4 sm:$0xff] %v972
        %v1027 = vld.sshfl [vmem:[#allocation1] sm:$0xff pattern:$0x73625140]
        %1028 = vst [vmem:[%s1015] ss:$4 sm:$0xff] %v972
        %v1029 = vld.sshfl [vmem:[#allocation1 + $0x20] sm:$0xff pattern:$0x73625140]
        %1030 = vst [vmem:[#allocation1] ss:$4 sm:$0xff] %v925
        %v1031 = vld.sshfl [vmem:[#allocation1] sm:$0xff pattern:$0x73625140]
        %1032 = vst [vmem:[%s1015] ss:$4 sm:$0xff] %v925
        %v1033 = vld.sshfl [vmem:[#allocation1 + $0x20] sm:$0xff pattern:$0x73625140]
        %1034 = vst [vmem:[#allocation1] ss:$4 sm:$0xff] %v975
        %v1035 = vld.sshfl [vmem:[#allocation1] sm:$0xff pattern:$0x73625140]
        %1036 = vst [vmem:[%s1015] ss:$4 sm:$0xff] %v975
        %v1037 = vld.sshfl [vmem:[#allocation1 + $0x20] sm:$0xff pattern:$0x73625140]
        %1038 = vst [vmem:[#allocation1] ss:$4 sm:$0xff] %v977
        %v1039 = vld.sshfl [vmem:[#allocation1] sm:$0xff pattern:$0x73625140]
        %1040 = vst [vmem:[%s1015] ss:$4 sm:$0xff] %v977
        %v1041 = vld.sshfl [vmem:[#allocation1 + $0x20] sm:$0xff pattern:$0x73625140]
        %1042 = vst [vmem:[#allocation1] ss:$4 sm:$0xff] %v979
        %v1043 = vld.sshfl [vmem:[#allocation1] sm:$0xff pattern:$0x73625140]
        %1044 = vst [vmem:[%s1015] ss:$4 sm:$0xff] %v979
        %v1045 = vld.sshfl [vmem:[#allocation1 + $0x20] sm:$0xff pattern:$0x73625140]
        %1046 = vrot.lane.b32.xlu0 %v1014, 96
        %v1047 = vpop.permute.xlu0 %1046
        %1048 = vrot.lane.b32.xlu0 %v1017, 96
        %v1049 = vpop.permute.xlu0 %1048
        %1050 = vrot.lane.b32.xlu0 %v1019, 96
        %v1051 = vpop.permute.xlu0 %1050
        %1052 = vrot.lane.b32.xlu0 %v1021, 96
        %v1053 = vpop.permute.xlu0 %1052
        %1054 = vrot.lane.b32.xlu0 %v1023, 96
        %v1055 = vpop.permute.xlu0 %1054
        %1056 = vrot.lane.b32.xlu0 %v1025, 96
        %v1057 = vpop.permute.xlu0 %1056
        %1058 = vrot.lane.b32.xlu0 %v1027, 96
        %v1059 = vpop.permute.xlu0 %1058
        %1060 = vrot.lane.b32.xlu0 %v1029, 96
        %v1061 = vpop.permute.xlu0 %1060
        %1062 = vrot.lane.b32.xlu0 %v1031, 96
        %v1063 = vpop.permute.xlu0 %1062
        %1064 = vrot.lane.b32.xlu0 %v1033, 96
        %v1065 = vpop.permute.xlu0 %1064
        %1066 = vrot.lane.b32.xlu0 %v1035, 96
        %v1067 = vpop.permute.xlu0 %1066
        %1068 = vrot.lane.b32.xlu0 %v1037, 96
        %v1069 = vpop.permute.xlu0 %1068
        %1070 = vrot.lane.b32.xlu0 %v1039, 96
        %v1071 = vpop.permute.xlu0 %1070
        %1072 = vrot.lane.b32.xlu0 %v1041, 96
        %v1073 = vpop.permute.xlu0 %1072
        %1074 = vrot.lane.b32.xlu0 %v1043, 96
        %v1075 = vpop.permute.xlu0 %1074
        %1076 = vrot.lane.b32.xlu0 %v1045, 96
        %v1077 = vpop.permute.xlu0 %1076
        %v1094 = vmul.f32 %v981, %v1047
        %v1095 = vmul.f32 %v982, %v1049
        %v1096 = vmul.f32 %v983, %v1051
        %v1097 = vmul.f32 %v984, %v1053
        %v1098 = vmul.f32 %v985, %v1055
        %v1099 = vmul.f32 %v986, %v1057
        %v1100 = vmul.f32 %v987, %v1059
        %v1101 = vmul.f32 %v988, %v1061
        %v1102 = vmul.f32 %v989, %v1063
        %v1103 = vmul.f32 %v990, %v1065
        %v1104 = vmul.f32 %v991, %v1067
        %v1105 = vmul.f32 %v992, %v1069
        %v1106 = vmul.f32 %v993, %v1071
        %v1107 = vmul.f32 %v994, %v1073
        %v1108 = vmul.f32 %v995, %v1075
        %v1109 = vmul.f32 %v996, %v1077
        %1126 = vst [vmem:[#allocation1] ss:$4 sm:$0xff] %v1094
        %s1127 = scalar_lea.vmem [#allocation1], 1
        %1128 = vst [vmem:[%s1127] ss:$4 sm:$0xff] %v1095
        %s1129 = scalar_lea.vmem [#allocation1], 2
        %1130 = vst [vmem:[%s1129] ss:$4 sm:$0xff] %v1096
        %s1131 = scalar_lea.vmem [#allocation1], 3
        %1132 = vst [vmem:[%s1131] ss:$4 sm:$0xff] %v1097
        %s1133 = scalar_lea.vmem [#allocation1], 32
        %1134 = vst [vmem:[%s1133] ss:$4 sm:$0xff] %v1098
        %s1135 = scalar_lea.vmem [#allocation1], 33
        %1136 = vst [vmem:[%s1135] ss:$4 sm:$0xff] %v1099
        %s1137 = scalar_lea.vmem [#allocation1], 34
        %1138 = vst [vmem:[%s1137] ss:$4 sm:$0xff] %v1100
        %s1139 = scalar_lea.vmem [#allocation1], 35
        %1140 = vst [vmem:[%s1139] ss:$4 sm:$0xff] %v1101
        %v1141 = vld.sshfl [vmem:[#allocation1] sm:$0xff pattern:$0x73625140]
        %v1142 = vld.sshfl [vmem:[#allocation1 + $0x20] sm:$0xff pattern:$0x73625140]
        %1143 = vst [vmem:[#allocation1] ss:$4 sm:$0xff] %v1102
        %1144 = vst [vmem:[%s1127] ss:$4 sm:$0xff] %v1103
        %1145 = vst [vmem:[%s1129] ss:$4 sm:$0xff] %v1104
        %1146 = vst [vmem:[%s1131] ss:$4 sm:$0xff] %v1105
        %1147 = vst [vmem:[%s1133] ss:$4 sm:$0xff] %v1106
        %1148 = vst [vmem:[%s1135] ss:$4 sm:$0xff] %v1107
        %1149 = vst [vmem:[%s1137] ss:$4 sm:$0xff] %v1108
        %1150 = vst [vmem:[%s1139] ss:$4 sm:$0xff] %v1109
        %v1151 = vld.sshfl [vmem:[#allocation1] sm:$0xff pattern:$0x73625140]
        %v1152 = vld.sshfl [vmem:[#allocation1 + $0x20] sm:$0xff pattern:$0x73625140]
        %v1153 = vsel %vm897, %v1141, 0
        %v1155 = vsel %vm897, %v1142, 0
        %v1157 = vsel %vm897, %v1151, 0
        %v1159 = vsel %vm897, %v1152, 0
        %1161 = vmatpush.msra.mxu0 0.0
        %1162 = vmatpush.msra.mxu0 0.0
        %1163 = vmatpush.msra.mxu0 0.0
        %1164 = vmatpush.msra.mxu0 0.0
        %1165 = vmatpush.msra.mxu0 0.0
        %1166 = vmatpush.msra.mxu0 0.0
        %1167 = vmatpush.msra.mxu0 0.0
        %1168 = vmatpush.msra.mxu0 0.0
        %1169 = vmatpush.msra.mxu0 0.0
        %1170 = vmatpush.msra.mxu0 0.0
        %1171 = vmatpush.msra.mxu0 0.0
        %1172 = vmatpush.msra.mxu0 0.0
        %1173 = vmatpush.msra.mxu0 %v956
        %1174 = vmatpush.msra.mxu0 %v955
        %1175 = vmatpush.msra.mxu0 %v954
        %1176 = vmatpush.msra.mxu0 %v953
        %1177 = vmatmul.f32.gmra.mxu0 %v1153
        %v1178 = vpop.f32.mrf.mxu0
        %v1179 = vadd.f32 0.0, %v1178
        %1180 = vmatmul.f32.gmra.mxu0 %v1155
        %v1181 = vpop.f32.mrf.mxu0
        %v1182 = vadd.f32 0.0, %v1181
        %1183 = vmatmul.f32.gmra.mxu0 %v1157
        %v1184 = vpop.f32.mrf.mxu0
        %v1185 = vadd.f32 0.0, %v1184
        %1186 = vmatmul.f32.gmra.mxu0 %v1159
        %v1187 = vpop.f32.mrf.mxu0
        %v1188 = vadd.f32 0.0, %v1187
        %1189 = vdwg.mxu0
        %v1194 = vrot.slane %v1179, 2
        %v1195 = vrot.slane %v1179, 4
        %v1196 = vrot.slane %v1179, 6
        %v1197 = vrot.slane %v1182, 2
        %v1198 = vrot.slane %v1182, 4
        %v1199 = vrot.slane %v1182, 6
        %v1200 = vrot.slane %v1185, 2
        %v1201 = vrot.slane %v1185, 4
        %v1202 = vrot.slane %v1185, 6
        %v1203 = vrot.slane %v1188, 2
        %v1204 = vrot.slane %v1188, 4
        %v1205 = vrot.slane %v1188, 6
        %v1218 = vmul.f32 %v1179, 0.35355338
        %v1219 = vmul.f32 %v1194, 0.35355338
        %v1220 = vmul.f32 %v1195, 0.35355338
        %v1221 = vmul.f32 %v1196, 0.35355338
        %v1222 = vmul.f32 %v1182, 0.35355338
        %v1223 = vmul.f32 %v1197, 0.35355338
        %v1224 = vmul.f32 %v1198, 0.35355338
        %v1225 = vmul.f32 %v1199, 0.35355338
        %v1226 = vmul.f32 %v1185, 0.35355338
        %v1227 = vmul.f32 %v1200, 0.35355338
        %v1228 = vmul.f32 %v1201, 0.35355338
        %v1229 = vmul.f32 %v1202, 0.35355338
        %v1230 = vmul.f32 %v1188, 0.35355338
        %v1231 = vmul.f32 %v1203, 0.35355338
        %v1232 = vmul.f32 %v1204, 0.35355338
        %v1233 = vmul.f32 %v1205, 0.35355338
        %vm1234 = vcmask 25600
        %v1235 = vsel %vm1234, %v1218, -inf
        %v1236 = vrot.slane %v1235, 4
        %v1237 = vmax.f32 %v1235, %v1236
        %v1238 = vrot.slane %v1237, 2
        %v1239 = vmax.f32 %v1237, %v1238
        %v1240 = vrot.slane %v1239, 1
        %v1241 = vmax.f32 %v1239, %v1240
        %v1242 = vsel %vm1234, %v1219, -inf
        %v1243 = vrot.slane %v1242, 4
        %v1244 = vmax.f32 %v1242, %v1243
        %v1245 = vrot.slane %v1244, 2
        %v1246 = vmax.f32 %v1244, %v1245
        %v1247 = vrot.slane %v1246, 1
        %v1248 = vmax.f32 %v1246, %v1247
        %v1249 = vsel %vm1234, %v1220, -inf
        %v1250 = vrot.slane %v1249, 4
        %v1251 = vmax.f32 %v1249, %v1250
        %v1252 = vrot.slane %v1251, 2
        %v1253 = vmax.f32 %v1251, %v1252
        %v1254 = vrot.slane %v1253, 1
        %v1255 = vmax.f32 %v1253, %v1254
        %v1256 = vsel %vm1234, %v1221, -inf
        %v1257 = vrot.slane %v1256, 4
        %v1258 = vmax.f32 %v1256, %v1257
        %v1259 = vrot.slane %v1258, 2
        %v1260 = vmax.f32 %v1258, %v1259
        %v1261 = vrot.slane %v1260, 1
        %v1262 = vmax.f32 %v1260, %v1261
        %v1263 = vsel %vm1234, %v1222, -inf
        %v1264 = vrot.slane %v1263, 4
        %v1265 = vmax.f32 %v1263, %v1264
        %v1266 = vrot.slane %v1265, 2
        %v1267 = vmax.f32 %v1265, %v1266
        %v1268 = vrot.slane %v1267, 1
        %v1269 = vmax.f32 %v1267, %v1268
        %v1270 = vsel %vm1234, %v1223, -inf
        %v1271 = vrot.slane %v1270, 4
        %v1272 = vmax.f32 %v1270, %v1271
        %v1273 = vrot.slane %v1272, 2
        %v1274 = vmax.f32 %v1272, %v1273
        %v1275 = vrot.slane %v1274, 1
        %v1276 = vmax.f32 %v1274, %v1275
        %v1277 = vsel %vm1234, %v1224, -inf
        %v1278 = vrot.slane %v1277, 4
        %v1279 = vmax.f32 %v1277, %v1278
        %v1280 = vrot.slane %v1279, 2
        %v1281 = vmax.f32 %v1279, %v1280
        %v1282 = vrot.slane %v1281, 1
        %v1283 = vmax.f32 %v1281, %v1282
        %v1284 = vsel %vm1234, %v1225, -inf
        %v1285 = vrot.slane %v1284, 4
        %v1286 = vmax.f32 %v1284, %v1285
        %v1287 = vrot.slane %v1286, 2
        %v1288 = vmax.f32 %v1286, %v1287
        %v1289 = vrot.slane %v1288, 1
        %v1290 = vmax.f32 %v1288, %v1289
        %v1291 = vsel %vm1234, %v1226, -inf
        %v1292 = vrot.slane %v1291, 4
        %v1293 = vmax.f32 %v1291, %v1292
        %v1294 = vrot.slane %v1293, 2
        %v1295 = vmax.f32 %v1293, %v1294
        %v1296 = vrot.slane %v1295, 1
        %v1297 = vmax.f32 %v1295, %v1296
        %v1298 = vsel %vm1234, %v1227, -inf
        %v1299 = vrot.slane %v1298, 4
        %v1300 = vmax.f32 %v1298, %v1299
        %v1301 = vrot.slane %v1300, 2
        %v1302 = vmax.f32 %v1300, %v1301
        %v1303 = vrot.slane %v1302, 1
        %v1304 = vmax.f32 %v1302, %v1303
        %v1305 = vsel %vm1234, %v1228, -inf
        %v1306 = vrot.slane %v1305, 4
        %v1307 = vmax.f32 %v1305, %v1306
        %v1308 = vrot.slane %v1307, 2
        %v1309 = vmax.f32 %v1307, %v1308
        %v1310 = vrot.slane %v1309, 1
        %v1311 = vmax.f32 %v1309, %v1310
        %v1312 = vsel %vm1234, %v1229, -inf
        %v1313 = vrot.slane %v1312, 4
        %v1314 = vmax.f32 %v1312, %v1313
        %v1315 = vrot.slane %v1314, 2
        %v1316 = vmax.f32 %v1314, %v1315
        %v1317 = vrot.slane %v1316, 1
        %v1318 = vmax.f32 %v1316, %v1317
        %v1319 = vsel %vm1234, %v1230, -inf
        %v1320 = vrot.slane %v1319, 4
        %v1321 = vmax.f32 %v1319, %v1320
        %v1322 = vrot.slane %v1321, 2
        %v1323 = vmax.f32 %v1321, %v1322
        %v1324 = vrot.slane %v1323, 1
        %v1325 = vmax.f32 %v1323, %v1324
        %v1326 = vsel %vm1234, %v1231, -inf
        %v1327 = vrot.slane %v1326, 4
        %v1328 = vmax.f32 %v1326, %v1327
        %v1329 = vrot.slane %v1328, 2
        %v1330 = vmax.f32 %v1328, %v1329
        %v1331 = vrot.slane %v1330, 1
        %v1332 = vmax.f32 %v1330, %v1331
        %v1333 = vsel %vm1234, %v1232, -inf
        %v1334 = vrot.slane %v1333, 4
        %v1335 = vmax.f32 %v1333, %v1334
        %v1336 = vrot.slane %v1335, 2
        %v1337 = vmax.f32 %v1335, %v1336
        %v1338 = vrot.slane %v1337, 1
        %v1339 = vmax.f32 %v1337, %v1338
        %v1340 = vsel %vm1234, %v1233, -inf
        %v1341 = vrot.slane %v1340, 4
        %v1342 = vmax.f32 %v1340, %v1341
        %v1343 = vrot.slane %v1342, 2
        %v1344 = vmax.f32 %v1342, %v1343
        %v1345 = vrot.slane %v1344, 1
        %v1346 = vmax.f32 %v1344, %v1345
        %v1347 = vsub.f32 %v1218, %v1241
        %v1348 = vsub.f32 %v1219, %v1248
        %v1349 = vsub.f32 %v1220, %v1255
        %v1350 = vsub.f32 %v1221, %v1262
        %v1351 = vsub.f32 %v1222, %v1269
        %v1352 = vsub.f32 %v1223, %v1276
        %v1353 = vsub.f32 %v1224, %v1283
        %v1354 = vsub.f32 %v1225, %v1290
        %v1355 = vsub.f32 %v1226, %v1297
        %v1356 = vsub.f32 %v1227, %v1304
        %v1357 = vsub.f32 %v1228, %v1311
        %v1358 = vsub.f32 %v1229, %v1318
        %v1359 = vsub.f32 %v1230, %v1325
        %v1360 = vsub.f32 %v1231, %v1332
        %v1361 = vsub.f32 %v1232, %v1339
        %v1362 = vsub.f32 %v1233, %v1346
        %v1363 = vmul.f32 %v1347, 1.442695
        %v1364 = vpow.pop %v1363
        %v1365 = vmul.f32 %v1348, 1.442695
        %v1366 = vpow.pop %v1365
        %v1367 = vmul.f32 %v1349, 1.442695
        %v1368 = vpow.pop %v1367
        %v1369 = vmul.f32 %v1350, 1.442695
        %v1370 = vpow.pop %v1369
        %v1371 = vmul.f32 %v1351, 1.442695
        %v1372 = vpow.pop %v1371
        %v1373 = vmul.f32 %v1352, 1.442695
        %v1374 = vpow.pop %v1373
        %v1375 = vmul.f32 %v1353, 1.442695
        %v1376 = vpow.pop %v1375
        %v1377 = vmul.f32 %v1354, 1.442695
        %v1378 = vpow.pop %v1377
        %v1379 = vmul.f32 %v1355, 1.442695
        %v1380 = vpow.pop %v1379
        %v1381 = vmul.f32 %v1356, 1.442695
        %v1382 = vpow.pop %v1381
        %v1383 = vmul.f32 %v1357, 1.442695
        %v1384 = vpow.pop %v1383
        %v1385 = vmul.f32 %v1358, 1.442695
        %v1386 = vpow.pop %v1385
        %v1387 = vmul.f32 %v1359, 1.442695
        %v1388 = vpow.pop %v1387
        %v1389 = vmul.f32 %v1360, 1.442695
        %v1390 = vpow.pop %v1389
        %v1391 = vmul.f32 %v1361, 1.442695
        %v1392 = vpow.pop %v1391
        %v1393 = vmul.f32 %v1362, 1.442695
        %v1394 = vpow.pop %v1393
        %v1395 = vsel %vm1234, %v1364, 0.0
        %v1396 = vrot.slane %v1395, 4
        %v1397 = vadd.f32 %v1395, %v1396
        %v1398 = vrot.slane %v1397, 2
        %v1399 = vadd.f32 %v1397, %v1398
        %v1400 = vrot.slane %v1399, 1
        %v1401 = vadd.f32 %v1399, %v1400
        %v1402 = vsel %vm1234, %v1366, 0.0
        %v1403 = vrot.slane %v1402, 4
        %v1404 = vadd.f32 %v1402, %v1403
        %v1405 = vrot.slane %v1404, 2
        %v1406 = vadd.f32 %v1404, %v1405
        %v1407 = vrot.slane %v1406, 1
        %v1408 = vadd.f32 %v1406, %v1407
        %v1409 = vsel %vm1234, %v1368, 0.0
        %v1410 = vrot.slane %v1409, 4
        %v1411 = vadd.f32 %v1409, %v1410
        %v1412 = vrot.slane %v1411, 2
        %v1413 = vadd.f32 %v1411, %v1412
        %v1414 = vrot.slane %v1413, 1
        %v1415 = vadd.f32 %v1413, %v1414
        %v1416 = vsel %vm1234, %v1370, 0.0
        %v1417 = vrot.slane %v1416, 4
        %v1418 = vadd.f32 %v1416, %v1417
        %v1419 = vrot.slane %v1418, 2
        %v1420 = vadd.f32 %v1418, %v1419
        %v1421 = vrot.slane %v1420, 1
        %v1422 = vadd.f32 %v1420, %v1421
        %v1423 = vsel %vm1234, %v1372, 0.0
        %v1424 = vrot.slane %v1423, 4
        %v1425 = vadd.f32 %v1423, %v1424
        %v1426 = vrot.slane %v1425, 2
        %v1427 = vadd.f32 %v1425, %v1426
        %v1428 = vrot.slane %v1427, 1
        %v1429 = vadd.f32 %v1427, %v1428
        %v1430 = vsel %vm1234, %v1374, 0.0
        %v1431 = vrot.slane %v1430, 4
        %v1432 = vadd.f32 %v1430, %v1431
        %v1433 = vrot.slane %v1432, 2
        %v1434 = vadd.f32 %v1432, %v1433
        %v1435 = vrot.slane %v1434, 1
        %v1436 = vadd.f32 %v1434, %v1435
        %v1437 = vsel %vm1234, %v1376, 0.0
        %v1438 = vrot.slane %v1437, 4
        %v1439 = vadd.f32 %v1437, %v1438
        %v1440 = vrot.slane %v1439, 2
        %v1441 = vadd.f32 %v1439, %v1440
        %v1442 = vrot.slane %v1441, 1
        %v1443 = vadd.f32 %v1441, %v1442
        %v1444 = vsel %vm1234, %v1378, 0.0
        %v1445 = vrot.slane %v1444, 4
        %v1446 = vadd.f32 %v1444, %v1445
        %v1447 = vrot.slane %v1446, 2
        %v1448 = vadd.f32 %v1446, %v1447
        %v1449 = vrot.slane %v1448, 1
        %v1450 = vadd.f32 %v1448, %v1449
        %v1451 = vsel %vm1234, %v1380, 0.0
        %v1452 = vrot.slane %v1451, 4
        %v1453 = vadd.f32 %v1451, %v1452
        %v1454 = vrot.slane %v1453, 2
        %v1455 = vadd.f32 %v1453, %v1454
        %v1456 = vrot.slane %v1455, 1
        %v1457 = vadd.f32 %v1455, %v1456
        %v1458 = vsel %vm1234, %v1382, 0.0
        %v1459 = vrot.slane %v1458, 4
        %v1460 = vadd.f32 %v1458, %v1459
        %v1461 = vrot.slane %v1460, 2
        %v1462 = vadd.f32 %v1460, %v1461
        %v1463 = vrot.slane %v1462, 1
        %v1464 = vadd.f32 %v1462, %v1463
        %v1465 = vsel %vm1234, %v1384, 0.0
        %v1466 = vrot.slane %v1465, 4
        %v1467 = vadd.f32 %v1465, %v1466
        %v1468 = vrot.slane %v1467, 2
        %v1469 = vadd.f32 %v1467, %v1468
        %v1470 = vrot.slane %v1469, 1
        %v1471 = vadd.f32 %v1469, %v1470
        %v1472 = vsel %vm1234, %v1386, 0.0
        %v1473 = vrot.slane %v1472, 4
        %v1474 = vadd.f32 %v1472, %v1473
        %v1475 = vrot.slane %v1474, 2
        %v1476 = vadd.f32 %v1474, %v1475
        %v1477 = vrot.slane %v1476, 1
        %v1478 = vadd.f32 %v1476, %v1477
        %v1479 = vsel %vm1234, %v1388, 0.0
        %v1480 = vrot.slane %v1479, 4
        %v1481 = vadd.f32 %v1479, %v1480
        %v1482 = vrot.slane %v1481, 2
        %v1483 = vadd.f32 %v1481, %v1482
        %v1484 = vrot.slane %v1483, 1
        %v1485 = vadd.f32 %v1483, %v1484
        %v1486 = vsel %vm1234, %v1390, 0.0
        %v1487 = vrot.slane %v1486, 4
        %v1488 = vadd.f32 %v1486, %v1487
        %v1489 = vrot.slane %v1488, 2
        %v1490 = vadd.f32 %v1488, %v1489
        %v1491 = vrot.slane %v1490, 1
        %v1492 = vadd.f32 %v1490, %v1491
        %v1493 = vsel %vm1234, %v1392, 0.0
        %v1494 = vrot.slane %v1493, 4
        %v1495 = vadd.f32 %v1493, %v1494
        %v1496 = vrot.slane %v1495, 2
        %v1497 = vadd.f32 %v1495, %v1496
        %v1498 = vrot.slane %v1497, 1
        %v1499 = vadd.f32 %v1497, %v1498
        %v1500 = vsel %vm1234, %v1394, 0.0
        %v1501 = vrot.slane %v1500, 4
        %v1502 = vadd.f32 %v1500, %v1501
        %v1503 = vrot.slane %v1502, 2
        %v1504 = vadd.f32 %v1502, %v1503
        %v1505 = vrot.slane %v1504, 1
        %v1506 = vadd.f32 %v1504, %v1505
        %v1507 = vrcp.pop %v1401
        %v1508 = vrcp.pop %v1408
        %v1509 = vrcp.pop %v1415
        %v1510 = vrcp.pop %v1422
        %v1511 = vrcp.pop %v1429
        %v1512 = vrcp.pop %v1436
        %v1513 = vrcp.pop %v1443
        %v1514 = vrcp.pop %v1450
        %v1515 = vrcp.pop %v1457
        %v1516 = vrcp.pop %v1464
        %v1517 = vrcp.pop %v1471
        %v1518 = vrcp.pop %v1478
        %v1519 = vrcp.pop %v1485
        %v1520 = vrcp.pop %v1492
        %v1521 = vrcp.pop %v1499
        %v1522 = vrcp.pop %v1506
        %v1523 = vmul.f32 %v1364, %v1507
        %v1524 = vmul.f32 %v1366, %v1508
        %v1525 = vmul.f32 %v1368, %v1509
        %v1526 = vmul.f32 %v1370, %v1510
        %v1527 = vmul.f32 %v1372, %v1511
        %v1528 = vmul.f32 %v1374, %v1512
        %v1529 = vmul.f32 %v1376, %v1513
        %v1530 = vmul.f32 %v1378, %v1514
        %v1531 = vmul.f32 %v1380, %v1515
        %v1532 = vmul.f32 %v1382, %v1516
        %v1533 = vmul.f32 %v1384, %v1517
        %v1534 = vmul.f32 %v1386, %v1518
        %v1535 = vmul.f32 %v1388, %v1519
        %v1536 = vmul.f32 %v1390, %v1520
        %v1537 = vmul.f32 %v1392, %v1521
        %v1538 = vmul.f32 %v1394, %v1522
        %1555 = vst [vmem:[#allocation1] ss:$4 sm:$0xff] %v1523
        %s1556 = scalar_lea.vmem [#allocation1], 1
        %1557 = vst [vmem:[%s1556] ss:$4 sm:$0xff] %v1524
        %s1558 = scalar_lea.vmem [#allocation1], 2
        %1559 = vst [vmem:[%s1558] ss:$4 sm:$0xff] %v1525
        %s1560 = scalar_lea.vmem [#allocation1], 3
        %1561 = vst [vmem:[%s1560] ss:$4 sm:$0xff] %v1526
        %s1562 = scalar_lea.vmem [#allocation1], 32
        %1563 = vst [vmem:[%s1562] ss:$4 sm:$0xff] %v1527
        %s1564 = scalar_lea.vmem [#allocation1], 33
        %1565 = vst [vmem:[%s1564] ss:$4 sm:$0xff] %v1528
        %s1566 = scalar_lea.vmem [#allocation1], 34
        %1567 = vst [vmem:[%s1566] ss:$4 sm:$0xff] %v1529
        %s1568 = scalar_lea.vmem [#allocation1], 35
        %1569 = vst [vmem:[%s1568] ss:$4 sm:$0xff] %v1530
        %v1570 = vld.sshfl [vmem:[#allocation1] sm:$0xff pattern:$0x73625140]
        %v1571 = vld.sshfl [vmem:[#allocation1 + $0x20] sm:$0xff pattern:$0x73625140]
        %1572 = vst [vmem:[#allocation1] ss:$4 sm:$0xff] %v1531
        %1573 = vst [vmem:[%s1556] ss:$4 sm:$0xff] %v1532
        %1574 = vst [vmem:[%s1558] ss:$4 sm:$0xff] %v1533
        %1575 = vst [vmem:[%s1560] ss:$4 sm:$0xff] %v1534
        %1576 = vst [vmem:[%s1562] ss:$4 sm:$0xff] %v1535
        %1577 = vst [vmem:[%s1564] ss:$4 sm:$0xff] %v1536
        %1578 = vst [vmem:[%s1566] ss:$4 sm:$0xff] %v1537
        %1579 = vst [vmem:[%s1568] ss:$4 sm:$0xff] %v1538
        %v1580 = vld.sshfl [vmem:[#allocation1] sm:$0xff pattern:$0x73625140]
        %v1581 = vld.sshfl [vmem:[#allocation1 + $0x20] sm:$0xff pattern:$0x73625140]
        %vm1582 = vcmask 31744
        %v1583 = vsel %vm1582, %v1570, 0
        %v1585 = vsel %vm1582, %v1571, 0
        %v1587 = vsel %vm1582, %v1580, 0
        %v1589 = vsel %vm1582, %v1581, 0
        %vm1591 = vcmask 1043456
        %v1593 = vsel %vm1591, %v964, 0
        %1595 = vmatpush.msra.mxu0 0.0
        %1596 = vmatpush.msra.mxu0 0.0
        %1597 = vmatpush.msra.mxu0 0.0
        %1598 = vmatpush.msra.mxu0 0.0
        %1599 = vmatpush.msra.mxu0 0.0
        %1600 = vmatpush.msra.mxu0 0.0
        %1601 = vmatpush.msra.mxu0 0.0
        %1602 = vmatpush.msra.mxu0 0.0
        %1603 = vmatpush.msra.mxu0 0.0
        %1604 = vmatpush.msra.mxu0 0.0
        %1605 = vmatpush.msra.mxu0 0.0
        %1606 = vmatpush.msra.mxu0 0.0
        %1607 = vmatpush.msra.mxu0 0.0
        %1608 = vmatpush.msra.mxu0 0.0
        %1609 = vmatpush.msra.mxu0 0.0
        %1610 = vmatpush.msra.mxu0 %v1593
        %1611 = vmatmul.f32.gmra.mxu0 %v1583
        %v1612 = vpop.f32.mrf.mxu0
        %v1613 = vadd.f32 0.0, %v1612
        %1614 = vmatmul.f32.gmra.mxu0 %v1585
        %v1615 = vpop.f32.mrf.mxu0
        %v1616 = vadd.f32 0.0, %v1615
        %1617 = vmatmul.f32.gmra.mxu0 %v1587
        %v1618 = vpop.f32.mrf.mxu0
        %v1619 = vadd.f32 0.0, %v1618
        %1620 = vmatmul.f32.gmra.mxu0 %v1589
        %v1621 = vpop.f32.mrf.mxu0
        %v1622 = vadd.f32 0.0, %v1621
        %1623 = vdwg.mxu0
        %v1628 = vrot.slane %v1613, 2
        %v1629 = vrot.slane %v1613, 4
        %v1630 = vrot.slane %v1613, 6
        %v1631 = vrot.slane %v1616, 2
        %v1632 = vrot.slane %v1616, 4
        %v1633 = vrot.slane %v1616, 6
        %v1634 = vrot.slane %v1619, 2
        %v1635 = vrot.slane %v1619, 4
        %v1636 = vrot.slane %v1619, 6
        %v1637 = vrot.slane %v1622, 2
        %v1638 = vrot.slane %v1622, 4
        %v1639 = vrot.slane %v1622, 6
        %1652 = vrot.lane.b32.xlu0 %v922, 64
        %v1653 = vpop.permute.xlu0 %1652
        %1654 = vrot.lane.b32.xlu0 %v968, 64
        %v1655 = vpop.permute.xlu0 %1654
        %1656 = vrot.lane.b32.xlu0 %v970, 64
        %v1657 = vpop.permute.xlu0 %1656
        %1658 = vrot.lane.b32.xlu0 %v972, 64
        %v1659 = vpop.permute.xlu0 %1658
        %1660 = vrot.lane.b32.xlu0 %v925, 64
        %v1661 = vpop.permute.xlu0 %1660
        %1662 = vrot.lane.b32.xlu0 %v975, 64
        %v1663 = vpop.permute.xlu0 %1662
        %1664 = vrot.lane.b32.xlu0 %v977, 64
        %v1665 = vpop.permute.xlu0 %1664
        %1666 = vrot.lane.b32.xlu0 %v979, 64
        %v1667 = vpop.permute.xlu0 %1666
        %v1676 = vmul.f32 %v1613, %v1653
        %v1677 = vmul.f32 %v1628, %v1653
        %v1678 = vmul.f32 %v1629, %v1655
        %v1679 = vmul.f32 %v1630, %v1655
        %v1680 = vmul.f32 %v1616, %v1657
        %v1681 = vmul.f32 %v1631, %v1657
        %v1682 = vmul.f32 %v1632, %v1659
        %v1683 = vmul.f32 %v1633, %v1659
        %v1684 = vmul.f32 %v1619, %v1661
        %v1685 = vmul.f32 %v1634, %v1661
        %v1686 = vmul.f32 %v1635, %v1663
        %v1687 = vmul.f32 %v1636, %v1663
        %v1688 = vmul.f32 %v1622, %v1665
        %v1689 = vmul.f32 %v1637, %v1665
        %v1690 = vmul.f32 %v1638, %v1667
        %v1691 = vmul.f32 %v1639, %v1667
        %vm1692 = vcmask 254976
        %v1693 = vsel %vm1692, %v1676, 0.0
        %v1694 = vrot.slane %v1693, 4
        %v1695 = vadd.f32 %v1693, %v1694
        %v1696 = vrot.slane %v1695, 2
        %v1697 = vadd.f32 %v1695, %v1696
        %v1698 = vrot.slane %v1697, 1
        %v1699 = vadd.f32 %v1697, %v1698
        %v1700 = vsel %vm1692, %v1677, 0.0
        %v1701 = vrot.slane %v1700, 4
        %v1702 = vadd.f32 %v1700, %v1701
        %v1703 = vrot.slane %v1702, 2
        %v1704 = vadd.f32 %v1702, %v1703
        %v1705 = vrot.slane %v1704, 1
        %v1706 = vadd.f32 %v1704, %v1705
        %v1707 = vsel %vm1692, %v1678, 0.0
        %v1708 = vrot.slane %v1707, 4
        %v1709 = vadd.f32 %v1707, %v1708
        %v1710 = vrot.slane %v1709, 2
        %v1711 = vadd.f32 %v1709, %v1710
        %v1712 = vrot.slane %v1711, 1
        %v1713 = vadd.f32 %v1711, %v1712
        %v1714 = vsel %vm1692, %v1679, 0.0
        %v1715 = vrot.slane %v1714, 4
        %v1716 = vadd.f32 %v1714, %v1715
        %v1717 = vrot.slane %v1716, 2
        %v1718 = vadd.f32 %v1716, %v1717
        %v1719 = vrot.slane %v1718, 1
        %v1720 = vadd.f32 %v1718, %v1719
        %v1721 = vsel %vm1692, %v1680, 0.0
        %v1722 = vrot.slane %v1721, 4
        %v1723 = vadd.f32 %v1721, %v1722
        %v1724 = vrot.slane %v1723, 2
        %v1725 = vadd.f32 %v1723, %v1724
        %v1726 = vrot.slane %v1725, 1
        %v1727 = vadd.f32 %v1725, %v1726
        %v1728 = vsel %vm1692, %v1681, 0.0
        %v1729 = vrot.slane %v1728, 4
        %v1730 = vadd.f32 %v1728, %v1729
        %v1731 = vrot.slane %v1730, 2
        %v1732 = vadd.f32 %v1730, %v1731
        %v1733 = vrot.slane %v1732, 1
        %v1734 = vadd.f32 %v1732, %v1733
        %v1735 = vsel %vm1692, %v1682, 0.0
        %v1736 = vrot.slane %v1735, 4
        %v1737 = vadd.f32 %v1735, %v1736
        %v1738 = vrot.slane %v1737, 2
        %v1739 = vadd.f32 %v1737, %v1738
        %v1740 = vrot.slane %v1739, 1
        %v1741 = vadd.f32 %v1739, %v1740
        %v1742 = vsel %vm1692, %v1683, 0.0
        %v1743 = vrot.slane %v1742, 4
        %v1744 = vadd.f32 %v1742, %v1743
        %v1745 = vrot.slane %v1744, 2
        %v1746 = vadd.f32 %v1744, %v1745
        %v1747 = vrot.slane %v1746, 1
        %v1748 = vadd.f32 %v1746, %v1747
        %v1749 = vsel %vm1692, %v1684, 0.0
        %v1750 = vrot.slane %v1749, 4
        %v1751 = vadd.f32 %v1749, %v1750
        %v1752 = vrot.slane %v1751, 2
        %v1753 = vadd.f32 %v1751, %v1752
        %v1754 = vrot.slane %v1753, 1
        %v1755 = vadd.f32 %v1753, %v1754
        %v1756 = vsel %vm1692, %v1685, 0.0
        %v1757 = vrot.slane %v1756, 4
        %v1758 = vadd.f32 %v1756, %v1757
        %v1759 = vrot.slane %v1758, 2
        %v1760 = vadd.f32 %v1758, %v1759
        %v1761 = vrot.slane %v1760, 1
        %v1762 = vadd.f32 %v1760, %v1761
        %v1763 = vsel %vm1692, %v1686, 0.0
        %v1764 = vrot.slane %v1763, 4
        %v1765 = vadd.f32 %v1763, %v1764
        %v1766 = vrot.slane %v1765, 2
        %v1767 = vadd.f32 %v1765, %v1766
        %v1768 = vrot.slane %v1767, 1
        %v1769 = vadd.f32 %v1767, %v1768
        %v1770 = vsel %vm1692, %v1687, 0.0
        %v1771 = vrot.slane %v1770, 4
        %v1772 = vadd.f32 %v1770, %v1771
        %v1773 = vrot.slane %v1772, 2
        %v1774 = vadd.f32 %v1772, %v1773
        %v1775 = vrot.slane %v1774, 1
        %v1776 = vadd.f32 %v1774, %v1775
        %v1777 = vsel %vm1692, %v1688, 0.0
        %v1778 = vrot.slane %v1777, 4
        %v1779 = vadd.f32 %v1777, %v1778
        %v1780 = vrot.slane %v1779, 2
        %v1781 = vadd.f32 %v1779, %v1780
        %v1782 = vrot.slane %v1781, 1
        %v1783 = vadd.f32 %v1781, %v1782
        %v1784 = vsel %vm1692, %v1689, 0.0
        %v1785 = vrot.slane %v1784, 4
        %v1786 = vadd.f32 %v1784, %v1785
        %v1787 = vrot.slane %v1786, 2
        %v1788 = vadd.f32 %v1786, %v1787
        %v1789 = vrot.slane %v1788, 1
        %v1790 = vadd.f32 %v1788, %v1789
        %v1791 = vsel %vm1692, %v1690, 0.0
        %v1792 = vrot.slane %v1791, 4
        %v1793 = vadd.f32 %v1791, %v1792
        %v1794 = vrot.slane %v1793, 2
        %v1795 = vadd.f32 %v1793, %v1794
        %v1796 = vrot.slane %v1795, 1
        %v1797 = vadd.f32 %v1795, %v1796
        %v1798 = vsel %vm1692, %v1691, 0.0
        %v1799 = vrot.slane %v1798, 4
        %v1800 = vadd.f32 %v1798, %v1799
        %v1801 = vrot.slane %v1800, 2
        %v1802 = vadd.f32 %v1800, %v1801
        %v1803 = vrot.slane %v1802, 1
        %v1804 = vadd.f32 %v1802, %v1803
        %v1805 = vld [vmem:[%s702] sm:$0xff]
        %v1806 = vld [vmem:[%s702 + $0x8] sm:$0xff]
        %v1807 = vld [vmem:[%s702 + $0x10] sm:$0xff]
        %v1808 = vld [vmem:[%s702 + $0x18] sm:$0xff]
        %v1809 = vld [vmem:[%s705] sm:$0x1]
        %v1811 = vperm.slane %v1809, 0
        %vm1829 = vcmask 1041409
        %v1830 = vsel %vm1829, %v1706, %v1699
        %vm1831 = vcmask 1042434
        %v1832 = vsel %vm1831, %v1713, %v1830
        %vm1833 = vcmask 1043459
        %v1834 = vsel %vm1833, %v1720, %v1832
        %vm1835 = vcmask 1044484
        %v1836 = vsel %vm1835, %v1727, %v1834
        %vm1837 = vcmask 1045509
        %v1838 = vsel %vm1837, %v1734, %v1836
        %vm1839 = vcmask 1046534
        %v1840 = vsel %vm1839, %v1741, %v1838
        %vm1841 = vcmask 1047559
        %v1842 = vsel %vm1841, %v1748, %v1840
        %v1843 = vsel %vm1829, %v1762, %v1755
        %v1844 = vsel %vm1831, %v1769, %v1843
        %v1845 = vsel %vm1833, %v1776, %v1844
        %v1846 = vsel %vm1835, %v1783, %v1845
        %v1847 = vsel %vm1837, %v1790, %v1846
        %v1848 = vsel %vm1839, %v1797, %v1847
        %v1849 = vsel %vm1841, %v1804, %v1848
        %v1850 = vsel %vm897, %v1842, 0
        %v1852 = vsel %vm897, %v1849, 0
        %1854 = vmatpush.msra.mxu0 0.0
        %1855 = vmatpush.msra.mxu0 0.0
        %1856 = vmatpush.msra.mxu0 0.0
        %1857 = vmatpush.msra.mxu0 0.0
        %1858 = vmatpush.msra.mxu0 0.0
        %1859 = vmatpush.msra.mxu0 0.0
        %1860 = vmatpush.msra.mxu0 0.0
        %1861 = vmatpush.msra.mxu0 0.0
        %1862 = vmatpush.msra.mxu0 0.0
        %1863 = vmatpush.msra.mxu0 0.0
        %1864 = vmatpush.msra.mxu0 0.0
        %1865 = vmatpush.msra.mxu0 0.0
        %1866 = vmatpush.msra.mxu0 %v1808
        %1867 = vmatpush.msra.mxu0 %v1807
        %1868 = vmatpush.msra.mxu0 %v1806
        %1869 = vmatpush.msra.mxu0 %v1805
        %1870 = vmatmul.f32.gmra.mxu0 %v1850
        %v1871 = vpop.f32.mrf.mxu0
        %v1872 = vadd.f32 %v1811, %v1871
        %1873 = vmatmul.f32.gmra.mxu0 %v1852
        %v1874 = vpop.f32.mrf.mxu0
        %v1875 = vadd.f32 %v1811, %v1874
        %1876 = vdwg.mxu0
        %v1877 = vadd.f32 %v887, %v1872
        %v1878 = vadd.f32 %v888, %v1875
        %v1879 = vsel %vm897, %v1877, 0.0
        %v1880 = vsel %vm897, %v1878, 0.0
        %v1881 = vadd.f32 %v1879, %v1880
        %v1882 = vrot.slane %v1881, 4
        %v1883 = vadd.f32 %v1881, %v1882
        %v1884 = vrot.slane %v1883, 2
        %v1885 = vadd.f32 %v1883, %v1884
        %v1886 = vrot.slane %v1885, 1
        %v1887 = vadd.f32 %v1885, %v1886
        %v1888 = vrcp.pop 16.0
        %v1889 = vmul.f32 16.0, %v1888
        %v1890 = vsub.f32 1.0, %v1889
        %v1891 = vmul.f32 %v1888, %v1890
        %v1892 = vadd.f32 %v1888, %v1891
        %vm1893 = vweird.f32 %v1888
        %v1894 = vsel %vm1893, %v1888, %v1892
        %v1895 = vmul.f32 %v1887, %v1894
        %v1896 = vmul.f32 %v1877, %v1877
        %v1897 = vmul.f32 %v1878, %v1878
        %v1898 = vsel %vm897, %v1896, 0.0
        %v1899 = vsel %vm897, %v1897, 0.0
        %v1900 = vadd.f32 %v1898, %v1899
        %v1901 = vrot.slane %v1900, 4
        %v1902 = vadd.f32 %v1900, %v1901
        %v1903 = vrot.slane %v1902, 2
        %v1904 = vadd.f32 %v1902, %v1903
        %v1905 = vrot.slane %v1904, 1
        %v1906 = vadd.f32 %v1904, %v1905
        %v1907 = vmul.f32 %v1906, %v1894
        %v1908 = vmul.f32 %v1895, %v1895
        %v1909 = vsub.f32 %v1907, %v1908
        %v1910 = vmax.f32 %v1909, 0.0
        %v1911 = vsub.f32 %v1877, %v1895
        %v1912 = vsub.f32 %v1878, %v1895
        %v1913 = vadd.f32 %v1910, 1e-05
        %v1914 = vrsqrt.pop %v1913
        %v1915 = vmul.f32 %v1914, %v1913
        %v1916 = vmul.f32 %v1915, %v1914
        %v1917 = vmul.f32 0.5, %v1916
        %v1918 = vsub.f32 1.5, %v1917
        %v1919 = vmul.f32 %v1914, %v1918
        %vm1920 = vweird.f32 %v1913
        %vm1921 = vweird.f32 %v1914
        %vm1922 = vmor %vm1920, %vm1921
        %v1923 = vsel %vm1922, %v1914, %v1919
        %v1924 = vmul.f32 %v1911, %v1923
        %v1925 = vmul.f32 %v1912, %v1923
        %v1926 = vld [vmem:[%s724] sm:$0x1]
        %v1928 = vperm.slane %v1926, 0
        %v1930 = vmul.f32 %v1924, %v1928
        %v1931 = vmul.f32 %v1925, %v1928
        %v1932 = vld [vmem:[%s727] sm:$0x1]
        %v1934 = vperm.slane %v1932, 0
        %v1936 = vadd.f32 %v1930, %v1934
        %v1937 = vadd.f32 %v1931, %v1934
        %v1938 = vld [vmem:[%s710] sm:$0xff]
        %v1939 = vld [vmem:[%s710 + $0x8] sm:$0xff]
        %v1940 = vld [vmem:[%s710 + $0x10] sm:$0xff]
        %v1941 = vld [vmem:[%s710 + $0x18] sm:$0xff]
        %v1942 = vld [vmem:[%s713] sm:$0x1]
        %v1944 = vperm.slane %v1942, 0
        %v1947 = vsel %vm897, %v1936, 0
        %v1950 = vsel %vm897, %v1937, 0
        %1952 = vmatpush.msra.mxu0 0.0
        %1953 = vmatpush.msra.mxu0 0.0
        %1954 = vmatpush.msra.mxu0 0.0
        %1955 = vmatpush.msra.mxu0 0.0
        %1956 = vmatpush.msra.mxu0 0.0
        %1957 = vmatpush.msra.mxu0 0.0
        %1958 = vmatpush.msra.mxu0 0.0
        %1959 = vmatpush.msra.mxu0 0.0
        %1960 = vmatpush.msra.mxu0 0.0
        %1961 = vmatpush.msra.mxu0 0.0
        %1962 = vmatpush.msra.mxu0 0.0
        %1963 = vmatpush.msra.mxu0 0.0
        %1964 = vmatpush.msra.mxu0 %v1941
        %1965 = vmatpush.msra.mxu0 %v1940
        %1966 = vmatpush.msra.mxu0 %v1939
        %1967 = vmatpush.msra.mxu0 %v1938
        %1968 = vmatmul.f32.gmra.mxu0 %v1947
        %v1969 = vpop.f32.mrf.mxu0
        %v1970 = vadd.f32 %v1944, %v1969
        %1971 = vmatmul.f32.gmra.mxu0 %v1950
        %v1972 = vpop.f32.mrf.mxu0
        %v1973 = vadd.f32 %v1944, %v1972
        %1974 = vdwg.mxu0
        %v1975 = vmul.f32 %v1970, 0.5
        %v1976 = vmul.f32 %v1973, 0.5
        %v1977 = vmul.f32 %v1970, 0.70710677
        %v1978 = vmul.f32 %v1973, 0.70710677
        %v1979 = vmul.f32 %v1977, %v1977
        %v1980 = vmin.f32 16.0, %v1979
        %v1981 = vmul.f32 %v1980, 2.1237322e-06
        %v1982 = vadd.f32 %v1981, 0.00028619796
        %v1983 = vmul.f32 %v1980, %v1982
        %v1984 = vadd.f32 %v1983, 0.0036580483
        %v1985 = vmul.f32 %v1980, %v1984
        %v1986 = vadd.f32 %v1985, 0.05243302
        %v1987 = vmul.f32 %v1980, %v1986
        %v1988 = vadd.f32 %v1987, 0.18741608
        %v1989 = vmul.f32 %v1980, %v1988
        %v1990 = vadd.f32 %v1989, 1.1283791
        %v1991 = vmul.f32 %v1977, %v1990
        %v1992 = vmul.f32 %v1980, 3.8918573e-05
        %v1993 = vadd.f32 %v1992, 0.001143296
        %v1994 = vmul.f32 %v1980, %v1993
        %v1995 = vadd.f32 %v1994, 0.014752088
        %v1996 = vmul.f32 %v1980, %v1995
        %v1997 = vadd.f32 %v1996, 0.112945676
        %v1998 = vmul.f32 %v1980, %v1997
        %v1999 = vadd.f32 %v1998, 0.4994258
        %v2000 = vmul.f32 %v1980, %v1999
        %v2001 = vadd.f32 %v2000, 1.0
        %v2002 = vrcp.pop %v2001
        %v2003 = vmul.f32 %v2001, %v2002
        %v2004 = vsub.f32 1.0, %v2003
        %v2005 = vmul.f32 %v2002, %v2004
        %v2006 = vadd.f32 %v2002, %v2005
        %vm2007 = vweird.f32 %v2001
        %vm2008 = vweird.f32 %v2002
        %vm2009 = vmor %vm2007, %vm2008
        %v2010 = vsel %vm2009, %v2002, %v2006
        %v2011 = vand.u32 2147483647, %v2001
        %vm2012 = vcmp.eq.f32.partialorder %v2011, 8.507059e+37
        %v2013 = vand.u32 %v2001, 2147483648
        %v2014 = vor.u32 1.1754944e-38, %v2013
        %v2015 = vsel %vm2012, %v2014, %v2010
        %v2016 = vmul.f32 %v1991, %v2015
        %v2017 = vmin.f32 %v2016, 1.0
        %v2018 = vmax.f32 %v2017, -1.0
        %v2019 = vmul.f32 %v1978, %v1978
        %v2020 = vmin.f32 16.0, %v2019
        %v2021 = vmul.f32 %v2020, 2.1237322e-06
        %v2022 = vadd.f32 %v2021, 0.00028619796
        %v2023 = vmul.f32 %v2020, %v2022
        %v2024 = vadd.f32 %v2023, 0.0036580483
        %v2025 = vmul.f32 %v2020, %v2024
        %v2026 = vadd.f32 %v2025, 0.05243302
        %v2027 = vmul.f32 %v2020, %v2026
        %v2028 = vadd.f32 %v2027, 0.18741608
        %v2029 = vmul.f32 %v2020, %v2028
        %v2030 = vadd.f32 %v2029, 1.1283791
        %v2031 = vmul.f32 %v1978, %v2030
        %v2032 = vmul.f32 %v2020, 3.8918573e-05
        %v2033 = vadd.f32 %v2032, 0.001143296
        %v2034 = vmul.f32 %v2020, %v2033
        %v2035 = vadd.f32 %v2034, 0.014752088
        %v2036 = vmul.f32 %v2020, %v2035
        %v2037 = vadd.f32 %v2036, 0.112945676
        %v2038 = vmul.f32 %v2020, %v2037
        %v2039 = vadd.f32 %v2038, 0.4994258
        %v2040 = vmul.f32 %v2020, %v2039
        %v2041 = vadd.f32 %v2040, 1.0
        %v2042 = vrcp.pop %v2041
        %v2043 = vmul.f32 %v2041, %v2042
        %v2044 = vsub.f32 1.0, %v2043
        %v2045 = vmul.f32 %v2042, %v2044
        %v2046 = vadd.f32 %v2042, %v2045
        %vm2047 = vweird.f32 %v2041
        %vm2048 = vweird.f32 %v2042
        %vm2049 = vmor %vm2047, %vm2048
        %v2050 = vsel %vm2049, %v2042, %v2046
        %v2051 = vand.u32 2147483647, %v2041
        %vm2052 = vcmp.eq.f32.partialorder %v2051, 8.507059e+37
        %v2053 = vand.u32 %v2041, 2147483648
        %v2054 = vor.u32 1.1754944e-38, %v2053
        %v2055 = vsel %vm2052, %v2054, %v2050
        %v2056 = vmul.f32 %v2031, %v2055
        %v2057 = vmin.f32 %v2056, 1.0
        %v2058 = vmax.f32 %v2057, -1.0
        %v2059 = vadd.f32 %v2018, 1.0
        %v2060 = vadd.f32 %v2058, 1.0
        %v2061 = vmul.f32 %v1975, %v2059
        %v2062 = vmul.f32 %v1976, %v2060
        %v2063 = vld [vmem:[%s718] sm:$0xff]
        %v2064 = vld [vmem:[%s718 + $0x8] sm:$0xff]
        %v2065 = vld [vmem:[%s718 + $0x10] sm:$0xff]
        %v2066 = vld [vmem:[%s718 + $0x18] sm:$0xff]
        %v2067 = vld [vmem:[%s718 + $0x20] sm:$0xff]
        %v2068 = vld [vmem:[%s718 + $0x28] sm:$0xff]
        %v2069 = vld [vmem:[%s718 + $0x30] sm:$0xff]
        %v2070 = vld [vmem:[%s718 + $0x38] sm:$0xff]
        %vm2071 = vcmask 523264
        %v2073 = vsel %vm2071, %v2061, 0
        %v2076 = vsel %vm2071, %v2062, 0
        %2078 = vmatpush.msra.mxu0 0.0
        %2079 = vmatpush.msra.mxu0 0.0
        %2080 = vmatpush.msra.mxu0 0.0
        %2081 = vmatpush.msra.mxu0 0.0
        %2082 = vmatpush.msra.mxu0 0.0
        %2083 = vmatpush.msra.mxu0 0.0
        %2084 = vmatpush.msra.mxu0 0.0
        %2085 = vmatpush.msra.mxu0 0.0
        %2086 = vmatpush.msra.mxu0 %v2070
        %2087 = vmatpush.msra.mxu0 %v2069
        %2088 = vmatpush.msra.mxu0 %v2068
        %2089 = vmatpush.msra.mxu0 %v2067
        %2090 = vmatpush.msra.mxu0 %v2066
        %2091 = vmatpush.msra.mxu0 %v2065
        %2092 = vmatpush.msra.mxu0 %v2064
        %2093 = vmatpush.msra.mxu0 %v2063
        %2094 = vmatmul.f32.gmra.mxu0 %v2073
        %v2095 = vpop.f32.mrf.mxu0
        %v2096 = vadd.f32 0.0, %v2095
        %2097 = vmatmul.f32.gmra.mxu0 %v2076
        %v2098 = vpop.f32.mrf.mxu0
        %v2099 = vadd.f32 0.0, %v2098
        %2100 = vdwg.mxu0
        %v2101 = vadd.f32 %v1936, %v2096
        %v2102 = vadd.f32 %v1937, %v2099
        %v2103 = vld [vmem:[%s721] sm:$0x1]
        %v2105 = vperm.slane %v2103, 0
        %v2107 = vadd.f32 %v2101, %v2105
        %v2108 = vadd.f32 %v2102, %v2105
        %v2109 = vsel %vm897, %v2107, 0.0
        %v2110 = vsel %vm897, %v2108, 0.0
        %v2111 = vadd.f32 %v2109, %v2110
        %v2112 = vrot.slane %v2111, 4
        %v2113 = vadd.f32 %v2111, %v2112
        %v2114 = vrot.slane %v2113, 2
        %v2115 = vadd.f32 %v2113, %v2114
        %v2116 = vrot.slane %v2115, 1
        %v2117 = vadd.f32 %v2115, %v2116
        %v2118 = vmul.f32 %v2117, %v1894
        %v2119 = vmul.f32 %v2107, %v2107
        %v2120 = vmul.f32 %v2108, %v2108
        %v2121 = vsel %vm897, %v2119, 0.0
        %v2122 = vsel %vm897, %v2120, 0.0
        %v2123 = vadd.f32 %v2121, %v2122
        %v2124 = vrot.slane %v2123, 4
        %v2125 = vadd.f32 %v2123, %v2124
        %v2126 = vrot.slane %v2125, 2
        %v2127 = vadd.f32 %v2125, %v2126
        %v2128 = vrot.slane %v2127, 1
        %v2129 = vadd.f32 %v2127, %v2128
        %v2130 = vmul.f32 %v2129, %v1894
        %v2131 = vmul.f32 %v2118, %v2118
        %v2132 = vsub.f32 %v2130, %v2131
        %v2133 = vmax.f32 %v2132, 0.0
        %v2134 = vsub.f32 %v2107, %v2118
        %v2135 = vsub.f32 %v2108, %v2118
        %v2136 = vadd.f32 %v2133, 1e-05
        %v2137 = vrsqrt.pop %v2136
        %v2138 = vmul.f32 %v2137, %v2136
        %v2139 = vmul.f32 %v2138, %v2137
        %v2140 = vmul.f32 0.5, %v2139
        %v2141 = vsub.f32 1.5, %v2140
        %v2142 = vmul.f32 %v2137, %v2141
        %vm2143 = vweird.f32 %v2136
        %vm2144 = vweird.f32 %v2137
        %vm2145 = vmor %vm2143, %vm2144
        %v2146 = vsel %vm2145, %v2137, %v2142
        %v2147 = vmul.f32 %v2134, %v2146
        %v2148 = vmul.f32 %v2135, %v2146
        %v2149 = vld [vmem:[%s730] sm:$0x1]
        %v2151 = vperm.slane %v2149, 0
        %v2153 = vmul.f32 %v2147, %v2151
        %v2154 = vmul.f32 %v2148, %v2151
        %v2155 = vld [vmem:[%s733] sm:$0x1]
        %v2157 = vperm.slane %v2155, 0
        %v2159 = vadd.f32 %v2153, %v2157
        %v2160 = vadd.f32 %v2154, %v2157
        %2161 = vst.msk [vmem:[#allocation2] sm:$0xff] %vm897, %v2159
        %2162 = vst.msk [vmem:[#allocation2 + $0x8] sm:$0xff] %vm897, %v2160
        %p2163 = scmp.eq.s32.totalorder %s30, 1
        // Predicated region
        $region97: #{tpu_custom_call.1} parent=91 // pred_check
          %p2164 = pneg %p2163
        $region98: #{tpu_custom_call.1} parent=91 // pred_check_branch
          %2166 = sbr.rel (%p2164) target = $region100
        $region99: #{tpu_custom_call.1} parent=91 // pred_region
          %v2167 = vmul.f32 %v2159, 0.5
          %v2168 = vmul.f32 %v2160, 0.5
          %v2169 = vmul.f32 %v2159, 0.70710677
          %v2170 = vmul.f32 %v2160, 0.70710677
          %v2171 = vmul.f32 %v2169, %v2169
          %v2172 = vmin.f32 16.0, %v2171
          %v2173 = vmul.f32 %v2172, 2.1237322e-06
          %v2174 = vadd.f32 %v2173, 0.00028619796
          %v2175 = vmul.f32 %v2172, %v2174
          %v2176 = vadd.f32 %v2175, 0.0036580483
          %v2177 = vmul.f32 %v2172, %v2176
          %v2178 = vadd.f32 %v2177, 0.05243302
          %v2179 = vmul.f32 %v2172, %v2178
          %v2180 = vadd.f32 %v2179, 0.18741608
          %v2181 = vmul.f32 %v2172, %v2180
          %v2182 = vadd.f32 %v2181, 1.1283791
          %v2183 = vmul.f32 %v2169, %v2182
          %v2184 = vmul.f32 %v2172, 3.8918573e-05
          %v2185 = vadd.f32 %v2184, 0.001143296
          %v2186 = vmul.f32 %v2172, %v2185
          %v2187 = vadd.f32 %v2186, 0.014752088
          %v2188 = vmul.f32 %v2172, %v2187
          %v2189 = vadd.f32 %v2188, 0.112945676
          %v2190 = vmul.f32 %v2172, %v2189
          %v2191 = vadd.f32 %v2190, 0.4994258
          %v2192 = vmul.f32 %v2172, %v2191
          %v2193 = vadd.f32 %v2192, 1.0
          %v2194 = vrcp.pop %v2193
          %v2195 = vmul.f32 %v2193, %v2194
          %v2196 = vsub.f32 1.0, %v2195
          %v2197 = vmul.f32 %v2194, %v2196
          %v2198 = vadd.f32 %v2194, %v2197
          %vm2199 = vweird.f32 %v2193
          %vm2200 = vweird.f32 %v2194
          %vm2201 = vmor %vm2199, %vm2200
          %v2202 = vsel %vm2201, %v2194, %v2198
          %v2203 = vand.u32 2147483647, %v2193
          %vm2204 = vcmp.eq.f32.partialorder %v2203, 8.507059e+37
          %v2205 = vand.u32 %v2193, 2147483648
          %v2206 = vor.u32 1.1754944e-38, %v2205
          %v2207 = vsel %vm2204, %v2206, %v2202
          %v2208 = vmul.f32 %v2183, %v2207
          %v2209 = vmin.f32 %v2208, 1.0
          %v2210 = vmax.f32 %v2209, -1.0
          %v2211 = vmul.f32 %v2170, %v2170
          %v2212 = vmin.f32 16.0, %v2211
          %v2213 = vmul.f32 %v2212, 2.1237322e-06
          %v2214 = vadd.f32 %v2213, 0.00028619796
          %v2215 = vmul.f32 %v2212, %v2214
          %v2216 = vadd.f32 %v2215, 0.0036580483
          %v2217 = vmul.f32 %v2212, %v2216
          %v2218 = vadd.f32 %v2217, 0.05243302
          %v2219 = vmul.f32 %v2212, %v2218
          %v2220 = vadd.f32 %v2219, 0.18741608
          %v2221 = vmul.f32 %v2212, %v2220
          %v2222 = vadd.f32 %v2221, 1.1283791
          %v2223 = vmul.f32 %v2170, %v2222
          %v2224 = vmul.f32 %v2212, 3.8918573e-05
          %v2225 = vadd.f32 %v2224, 0.001143296
          %v2226 = vmul.f32 %v2212, %v2225
          %v2227 = vadd.f32 %v2226, 0.014752088
          %v2228 = vmul.f32 %v2212, %v2227
          %v2229 = vadd.f32 %v2228, 0.112945676
          %v2230 = vmul.f32 %v2212, %v2229
          %v2231 = vadd.f32 %v2230, 0.4994258
          %v2232 = vmul.f32 %v2212, %v2231
          %v2233 = vadd.f32 %v2232, 1.0
          %v2234 = vrcp.pop %v2233
          %v2235 = vmul.f32 %v2233, %v2234
          %v2236 = vsub.f32 1.0, %v2235
          %v2237 = vmul.f32 %v2234, %v2236
          %v2238 = vadd.f32 %v2234, %v2237
          %vm2239 = vweird.f32 %v2233
          %vm2240 = vweird.f32 %v2234
          %vm2241 = vmor %vm2239, %vm2240
          %v2242 = vsel %vm2241, %v2234, %v2238
          %v2243 = vand.u32 2147483647, %v2233
          %vm2244 = vcmp.eq.f32.partialorder %v2243, 8.507059e+37
          %v2245 = vand.u32 %v2233, 2147483648
          %v2246 = vor.u32 1.1754944e-38, %v2245
          %v2247 = vsel %vm2244, %v2246, %v2242
          %v2248 = vmul.f32 %v2223, %v2247
          %v2249 = vmin.f32 %v2248, 1.0
          %v2250 = vmax.f32 %v2249, -1.0
          %v2251 = vadd.f32 %v2210, 1.0
          %v2252 = vadd.f32 %v2250, 1.0
          %v2253 = vmul.f32 %v2167, %v2251
          %v2254 = vmul.f32 %v2168, %v2252
          %v2257 = vrot.slane %v2253, 2
          %v2258 = vrot.slane %v2253, 4
          %v2259 = vrot.slane %v2253, 6
          %v2260 = vrot.slane %v2254, 2
          %v2261 = vrot.slane %v2254, 4
          %v2262 = vrot.slane %v2254, 6
          %v2263 = vld [vmem:[%s16] sm:$0xff]
          %v2264 = vld [vmem:[%s16 + $0x8] sm:$0xff]
          %v2265 = vld [vmem:[%s16 + $0x10] sm:$0xff]
          %v2266 = vld [vmem:[%s16 + $0x18] sm:$0xff]
          %v2267 = vld [vmem:[%s16 + $0x20] sm:$0xff]
          %v2268 = vld [vmem:[%s16 + $0x28] sm:$0xff]
          %v2269 = vld [vmem:[%s16 + $0x30] sm:$0xff]
          %v2270 = vld [vmem:[%s16 + $0x38] sm:$0xff]
          %v2271 = vld [vmem:[%s16 + $0x40] sm:$0xff]
          %v2272 = vld [vmem:[%s16 + $0x48] sm:$0xff]
          %v2273 = vld [vmem:[%s16 + $0x50] sm:$0xff]
          %v2274 = vld [vmem:[%s16 + $0x58] sm:$0xff]
          %v2275 = vld [vmem:[%s16 + $0x60] sm:$0xff]
          %v2276 = vld [vmem:[%s16 + $0x68] sm:$0xff]
          %v2277 = vld [vmem:[%s16 + $0x70] sm:$0xff]
          %v2278 = vld [vmem:[%s16 + $0x78] sm:$0xff]
          %v2279 = vld [vmem:[%s16 + $0x80] sm:$0xff]
          %v2280 = vld [vmem:[%s16 + $0x88] sm:$0xff]
          %v2281 = vld [vmem:[%s16 + $0x90] sm:$0xff]
          %v2282 = vld [vmem:[%s16 + $0x98] sm:$0xff]
          %v2283 = vld [vmem:[%s16 + $0xa0] sm:$0xff]
          %v2284 = vld [vmem:[%s16 + $0xa8] sm:$0xff]
          %v2285 = vld [vmem:[%s16 + $0xb0] sm:$0xff]
          %v2286 = vld [vmem:[%s16 + $0xb8] sm:$0xff]
          %v2287 = vld [vmem:[%s16 + $0xc0] sm:$0xff]
          %v2288 = vld [vmem:[%s16 + $0xc8] sm:$0xff]
          %v2289 = vld [vmem:[%s16 + $0xd0] sm:$0xff]
          %v2290 = vld [vmem:[%s16 + $0xd8] sm:$0xff]
          %v2291 = vld [vmem:[%s16 + $0xe0] sm:$0xff]
          %v2292 = vld [vmem:[%s16 + $0xe8] sm:$0xff]
          %v2293 = vld [vmem:[%s16 + $0xf0] sm:$0xff]
          %v2294 = vld [vmem:[%s16 + $0xf8] sm:$0xff]
          %v2295 = vsel %vm897, %v2253, 0
          %2297 = vmatpush.msra.mxu0 0.0
          %2298 = vmatpush.msra.mxu0 0.0
          %2299 = vmatpush.msra.mxu0 0.0
          %2300 = vmatpush.msra.mxu0 0.0
          %2301 = vmatpush.msra.mxu0 0.0
          %2302 = vmatpush.msra.mxu0 0.0
          %2303 = vmatpush.msra.mxu0 0.0
          %2304 = vmatpush.msra.mxu0 0.0
          %2305 = vmatpush.msra.mxu0 0.0
          %2306 = vmatpush.msra.mxu0 0.0
          %2307 = vmatpush.msra.mxu0 0.0
          %2308 = vmatpush.msra.mxu0 0.0
          %2309 = vmatpush.msra.mxu0 %v2266
          %2310 = vmatpush.msra.mxu0 %v2265
          %2311 = vmatpush.msra.mxu0 %v2264
          %2312 = vmatpush.msra.mxu0 %v2263
          %2313 = vmatmul.f32.gmra.mxu0 %v2295
          %v2314 = vpop.f32.mrf.mxu0
          %v2315 = vadd.f32 0.0, %v2314
          %2316 = vdwg.mxu0
          %v2317 = vsel %vm897, %v2257, 0
          %2319 = vmatpush.msra.mxu0 0.0
          %2320 = vmatpush.msra.mxu0 0.0
          %2321 = vmatpush.msra.mxu0 0.0
          %2322 = vmatpush.msra.mxu0 0.0
          %2323 = vmatpush.msra.mxu0 0.0
          %2324 = vmatpush.msra.mxu0 0.0
          %2325 = vmatpush.msra.mxu0 0.0
          %2326 = vmatpush.msra.mxu0 0.0
          %2327 = vmatpush.msra.mxu0 0.0
          %2328 = vmatpush.msra.mxu0 0.0
          %2329 = vmatpush.msra.mxu0 0.0
          %2330 = vmatpush.msra.mxu0 0.0
          %2331 = vmatpush.msra.mxu0 %v2270
          %2332 = vmatpush.msra.mxu0 %v2269
          %2333 = vmatpush.msra.mxu0 %v2268
          %2334 = vmatpush.msra.mxu0 %v2267
          %2335 = vmatmul.f32.gmra.mxu0 %v2317
          %v2336 = vpop.f32.mrf.mxu0
          %v2337 = vadd.f32 0.0, %v2336
          %2338 = vdwg.mxu0
          %v2339 = vsel %vm897, %v2258, 0
          %2341 = vmatpush.msra.mxu0 0.0
          %2342 = vmatpush.msra.mxu0 0.0
          %2343 = vmatpush.msra.mxu0 0.0
          %2344 = vmatpush.msra.mxu0 0.0
          %2345 = vmatpush.msra.mxu0 0.0
          %2346 = vmatpush.msra.mxu0 0.0
          %2347 = vmatpush.msra.mxu0 0.0
          %2348 = vmatpush.msra.mxu0 0.0
          %2349 = vmatpush.msra.mxu0 0.0
          %2350 = vmatpush.msra.mxu0 0.0
          %2351 = vmatpush.msra.mxu0 0.0
          %2352 = vmatpush.msra.mxu0 0.0
          %2353 = vmatpush.msra.mxu0 %v2274
          %2354 = vmatpush.msra.mxu0 %v2273
          %2355 = vmatpush.msra.mxu0 %v2272
          %2356 = vmatpush.msra.mxu0 %v2271
          %2357 = vmatmul.f32.gmra.mxu0 %v2339
          %v2358 = vpop.f32.mrf.mxu0
          %v2359 = vadd.f32 0.0, %v2358
          %2360 = vdwg.mxu0
          %v2361 = vsel %vm897, %v2259, 0
          %2363 = vmatpush.msra.mxu0 0.0
          %2364 = vmatpush.msra.mxu0 0.0
          %2365 = vmatpush.msra.mxu0 0.0
          %2366 = vmatpush.msra.mxu0 0.0
          %2367 = vmatpush.msra.mxu0 0.0
          %2368 = vmatpush.msra.mxu0 0.0
          %2369 = vmatpush.msra.mxu0 0.0
          %2370 = vmatpush.msra.mxu0 0.0
          %2371 = vmatpush.msra.mxu0 0.0
          %2372 = vmatpush.msra.mxu0 0.0
          %2373 = vmatpush.msra.mxu0 0.0
          %2374 = vmatpush.msra.mxu0 0.0
          %2375 = vmatpush.msra.mxu0 %v2278
          %2376 = vmatpush.msra.mxu0 %v2277
          %2377 = vmatpush.msra.mxu0 %v2276
          %2378 = vmatpush.msra.mxu0 %v2275
          %2379 = vmatmul.f32.gmra.mxu0 %v2361
          %v2380 = vpop.f32.mrf.mxu0
          %v2381 = vadd.f32 0.0, %v2380
          %2382 = vdwg.mxu0
          %v2383 = vsel %vm897, %v2254, 0
          %2385 = vmatpush.msra.mxu0 0.0
          %2386 = vmatpush.msra.mxu0 0.0
          %2387 = vmatpush.msra.mxu0 0.0
          %2388 = vmatpush.msra.mxu0 0.0
          %2389 = vmatpush.msra.mxu0 0.0
          %2390 = vmatpush.msra.mxu0 0.0
          %2391 = vmatpush.msra.mxu0 0.0
          %2392 = vmatpush.msra.mxu0 0.0
          %2393 = vmatpush.msra.mxu0 0.0
          %2394 = vmatpush.msra.mxu0 0.0
          %2395 = vmatpush.msra.mxu0 0.0
          %2396 = vmatpush.msra.mxu0 0.0
          %2397 = vmatpush.msra.mxu0 %v2282
          %2398 = vmatpush.msra.mxu0 %v2281
          %2399 = vmatpush.msra.mxu0 %v2280
          %2400 = vmatpush.msra.mxu0 %v2279
          %2401 = vmatmul.f32.gmra.mxu0 %v2383
          %v2402 = vpop.f32.mrf.mxu0
          %v2403 = vadd.f32 0.0, %v2402
          %2404 = vdwg.mxu0
          %v2405 = vsel %vm897, %v2260, 0
          %2407 = vmatpush.msra.mxu0 0.0
          %2408 = vmatpush.msra.mxu0 0.0
          %2409 = vmatpush.msra.mxu0 0.0
          %2410 = vmatpush.msra.mxu0 0.0
          %2411 = vmatpush.msra.mxu0 0.0
          %2412 = vmatpush.msra.mxu0 0.0
          %2413 = vmatpush.msra.mxu0 0.0
          %2414 = vmatpush.msra.mxu0 0.0
          %2415 = vmatpush.msra.mxu0 0.0
          %2416 = vmatpush.msra.mxu0 0.0
          %2417 = vmatpush.msra.mxu0 0.0
          %2418 = vmatpush.msra.mxu0 0.0
          %2419 = vmatpush.msra.mxu0 %v2286
          %2420 = vmatpush.msra.mxu0 %v2285
          %2421 = vmatpush.msra.mxu0 %v2284
          %2422 = vmatpush.msra.mxu0 %v2283
          %2423 = vmatmul.f32.gmra.mxu0 %v2405
          %v2424 = vpop.f32.mrf.mxu0
          %v2425 = vadd.f32 0.0, %v2424
          %2426 = vdwg.mxu0
          %v2427 = vsel %vm897, %v2261, 0
          %2429 = vmatpush.msra.mxu0 0.0
          %2430 = vmatpush.msra.mxu0 0.0
          %2431 = vmatpush.msra.mxu0 0.0
          %2432 = vmatpush.msra.mxu0 0.0
          %2433 = vmatpush.msra.mxu0 0.0
          %2434 = vmatpush.msra.mxu0 0.0
          %2435 = vmatpush.msra.mxu0 0.0
          %2436 = vmatpush.msra.mxu0 0.0
          %2437 = vmatpush.msra.mxu0 0.0
          %2438 = vmatpush.msra.mxu0 0.0
          %2439 = vmatpush.msra.mxu0 0.0
          %2440 = vmatpush.msra.mxu0 0.0
          %2441 = vmatpush.msra.mxu0 %v2290
          %2442 = vmatpush.msra.mxu0 %v2289
          %2443 = vmatpush.msra.mxu0 %v2288
          %2444 = vmatpush.msra.mxu0 %v2287
          %2445 = vmatmul.f32.gmra.mxu0 %v2427
          %v2446 = vpop.f32.mrf.mxu0
          %v2447 = vadd.f32 0.0, %v2446
          %2448 = vdwg.mxu0
          %v2449 = vsel %vm897, %v2262, 0
          %2451 = vmatpush.msra.mxu0 0.0
          %2452 = vmatpush.msra.mxu0 0.0
          %2453 = vmatpush.msra.mxu0 0.0
          %2454 = vmatpush.msra.mxu0 0.0
          %2455 = vmatpush.msra.mxu0 0.0
          %2456 = vmatpush.msra.mxu0 0.0
          %2457 = vmatpush.msra.mxu0 0.0
          %2458 = vmatpush.msra.mxu0 0.0
          %2459 = vmatpush.msra.mxu0 0.0
          %2460 = vmatpush.msra.mxu0 0.0
          %2461 = vmatpush.msra.mxu0 0.0
          %2462 = vmatpush.msra.mxu0 0.0
          %2463 = vmatpush.msra.mxu0 %v2294
          %2464 = vmatpush.msra.mxu0 %v2293
          %2465 = vmatpush.msra.mxu0 %v2292
          %2466 = vmatpush.msra.mxu0 %v2291
          %2467 = vmatmul.f32.gmra.mxu0 %v2449
          %v2468 = vpop.f32.mrf.mxu0
          %v2469 = vadd.f32 0.0, %v2468
          %2470 = vdwg.mxu0
          %vm2471 = vcmask 17408
          %v2472 = vsel %vm2471, %v2315, 0.0
          %v2473 = vsel %vm2471, %v2337, 0.0
          %v2474 = vadd.f32 %v2472, %v2473
          %v2475 = vsel %vm2471, %v2359, 0.0
          %v2476 = vadd.f32 %v2474, %v2475
          %v2477 = vsel %vm2471, %v2381, 0.0
          %v2478 = vadd.f32 %v2476, %v2477
          %v2479 = vsel %vm2471, %v2403, 0.0
          %v2480 = vadd.f32 %v2478, %v2479
          %v2481 = vsel %vm2471, %v2425, 0.0
          %v2482 = vadd.f32 %v2480, %v2481
          %v2483 = vsel %vm2471, %v2447, 0.0
          %v2484 = vadd.f32 %v2482, %v2483
          %v2485 = vsel %vm2471, %v2469, 0.0
          %v2486 = vadd.f32 %v2484, %v2485
          %v2487 = vld [vmem:[%s17] sm:$0x1]
          %v2489 = vperm.slane %v2487, 0
          %v2491 = vadd.f32 %v2486, %v2489
          %2492 = vst.msk [vmem:[#allocation3] sm:$0x3] %vm2471, %v2491
        $region100: #{tpu_custom_call.1} parent=91 // pred_fallthru
          _
        // Predicated region
        $region101: #{tpu_custom_call.1} parent=91 // pred_check
          %p2493 = pneg %p481
        $region102: #{tpu_custom_call.1} parent=91 // pred_check_branch
          %2495 = sbr.rel (%p2493) target = $region104
        $region103: #{tpu_custom_call.1} parent=91 // pred_region
          %2497 = vsyncadd [#allocation4], 0
          %s2499 = sshll.u32 [#allocation3], 4
          %s2500 = int_to_ptr.vmem [resolvable:$true] %s2499
          %s2501 = sshll.u32 %s18, 4
          %s2502 = int_to_ptr.hbm [resolvable:$true] %s2501
          %2504 = dma.vmem_to_hbm [thread:$0]  %s2500, 32, %s2502, [#allocation4]
        $region104: #{tpu_custom_call.1} parent=91 // pred_fallthru
          _
        // Predicated region
        $region105: #{tpu_custom_call.1} parent=91 // pred_check
          %p2505 = pneg %p481
        $region106: #{tpu_custom_call.1} parent=91 // pred_check_branch
          %2507 = sbr.rel (%p2505) target = $region108
        $region107: #{tpu_custom_call.1} parent=91 // pred_region
          %2509 = dma.done [#allocation4], 32
        $region108: #{tpu_custom_call.1} parent=91 // pred_fallthru
          _
      $region92: #{tpu_custom_call.1} parent=5 // pred_fallthru
        _
      %p2510 = scmp.le.s32.totalorder 2, %s25
      // Predicated region
      $region109: #{tpu_custom_call.1} parent=5 // pred_check
        %p2511 = pneg %p2510
      $region110: #{tpu_custom_call.1} parent=5 // pred_check_branch
        %2513 = sbr.rel (%p2511) target = $region112
      $region111: #{tpu_custom_call.1} parent=5 // pred_region
        %s2514 = ssub.s32 %s25, 2
      $region112: #{tpu_custom_call.1} parent=5 // pred_fallthru
        _
    $region6: #{tpu_custom_call.1} parent=1 // loop_footer
      %s29 = sadd.s32 1, %s25
    $region7: #{tpu_custom_call.1} parent=1 // loop_footer_branch
      %24 = sbr.rel target = $region3
    $region8: #{tpu_custom_call.1} parent=1 // loop_exit
      _
    %2515 = vsyncpa [#allocation4], 1
    %s2516 = scalar_lea.sflag [#allocation4], 1
    %2517 = vsyncpa %s2516, 1

</llo_original>
